<compile_context>
chip_gen: v7x
topology: tpu7x:2x2x1
jax: 0.10.0
libtpu: 0.0.40
codegen_flags: <defaults>
</compile_context>

<pallas_src>
import jax
import jax.numpy as jnp
from jax.experimental import pallas as pl
from jax.experimental.pallas import tpu as pltpu


def encoder_kernel(x_ref, w_ih_ref, w_hh_ref, b_ih_ref, b_hh_ref,
                   out_ref, hn_ref, gi_scratch):
    """Fused multi-layer GRU forward, fully VMEM-resident.

    x_ref     : (T, B, D)   time-major input sequence
    w_ih_ref  : (L, D, 3D)  fused, pre-transposed input->gate weights  (r|z|n)
    w_hh_ref  : (L, D, 3D)  fused, pre-transposed hidden->gate weights (r|z|n)
    b_ih_ref  : (L, 1, 3D)
    b_hh_ref  : (L, 1, 3D)
    out_ref   : (T, B, D)   last-layer hidden per step; also serves as the
                            VMEM-resident inter-layer activation buffer
    hn_ref    : (L, B, D)   final hidden state of each layer
    gi_scratch: (T, B, 3D)  hoisted input-projection scratch (VMEM)
    """
    T, B, D = x_ref.shape
    L = w_ih_ref.shape[0]

    for l in range(L):                              # static unroll over layers
        w_ih = w_ih_ref[l]                          # (D, 3D)
        w_hh = w_hh_ref[l]                          # (D, 3D)
        b_ih = b_ih_ref[l]                          # (1, 3D)
        b_hh = b_hh_ref[l]                          # (1, 3D)

        in_ref = x_ref if l == 0 else out_ref       # previous layer's output stays in VMEM

        # --- Hoisted input projection: independent of the recurrence, so issue
        # all T matmuls before entering the serial loop.  Kept as T statically
        # unrolled (B,D)@(D,3D) matmuls (rather than one (T*B,D) GEMM) to avoid
        # an in-kernel re-layouting reshape; they are off the critical path.
        for t in range(T):
            gi_scratch[t] = (
                jnp.dot(in_ref[t], w_ih, preferred_element_type=jnp.float32)
                + b_ih)

        # --- Serial recurrence: one fused matmul + gate math per step.
        def step(t, h):
            gi = gi_scratch[t]                                           # (B, 3D)
            gh = jnp.dot(h, w_hh, preferred_element_type=jnp.float32) + b_hh
            r = jax.nn.sigmoid(gi[:, :D] + gh[:, :D])
            z = jax.nn.sigmoid(gi[:, D:2 * D] + gh[:, D:2 * D])
            n = jnp.tanh(gi[:, 2 * D:] + r * gh[:, 2 * D:])              # b_hn stays inside r*(.)
            h_new = (1.0 - z) * n + z * h
            out_ref[t] = h_new.astype(out_ref.dtype)                     # VMEM store only
            return h_new

        h0 = jnp.zeros((B, D), jnp.float32)
        h_last = jax.lax.fori_loop(0, T, step, h0)
        hn_ref[l] = h_last.astype(hn_ref.dtype)                          # once per layer


def encoder_forward(x, params):
    """Equivalent of Encoder.forward.  x: (B, T, D) -> (output (B,T,D), hn (L,B,D))."""
    B, T, D = x.shape
    L = len(params)

    # Fuse the three gates into single matrices and pre-transpose so the kernel
    # computes x @ W (PyTorch layout is (3D, D), gate order r|z|n).
    w_ih_all = jnp.stack([w_ih.T for (w_ih, _, _, _) in params])          # (L, D, 3D)
    w_hh_all = jnp.stack([w_hh.T for (_, w_hh, _, _) in params])          # (L, D, 3D)
    b_ih_all = jnp.stack([b_ih.reshape(1, 3 * D) for (_, _, b_ih, _) in params])
    b_hh_all = jnp.stack([b_hh.reshape(1, 3 * D) for (_, _, _, b_hh) in params])

    x_tbd = jnp.swapaxes(x, 0, 1)   # time-major so the kernel indexes the leading dim

    vmem = pl.BlockSpec(memory_space=pltpu.MemorySpace.VMEM)
    out_tbd, hn = pl.pallas_call(
        encoder_kernel,
        out_shape=(
            jax.ShapeDtypeStruct((T, B, D), x.dtype),
            jax.ShapeDtypeStruct((L, B, D), x.dtype),
        ),
        in_specs=[vmem] * 5,
        out_specs=(vmem, vmem),
        scratch_shapes=[pltpu.VMEM((T, B, 3 * D), jnp.float32)],
    )(x_tbd, w_ih_all, w_hh_all, b_ih_all, b_hh_all)

    return jnp.swapaxes(out_tbd, 0, 1), hn


def init_gru_params(key, n_dim, layers):
    """Deterministic init mirroring nn.GRU shapes: U(-1/sqrt(H), 1/sqrt(H))."""
    std = 1.0 / jnp.sqrt(jnp.float32(n_dim))
    params = []
    for _ in range(layers):
        key, k1, k2, k3, k4 = jax.random.split(key, 5)
        w_ih = jax.random.uniform(k1, (3 * n_dim, n_dim), jnp.float32, -std, std)
        w_hh = jax.random.uniform(k2, (3 * n_dim, n_dim), jnp.float32, -std, std)
        b_ih = jax.random.uniform(k3, (3 * n_dim,), jnp.float32, -std, std)
        b_hh = jax.random.uniform(k4, (3 * n_dim,), jnp.float32, -std, std)
        params.append((w_ih, w_hh, b_ih, b_hh))
    return params


def gru_layer_ref(x, w_ih, w_hh, b_ih, b_hh):
    """Pure-JAX reference (lax.scan) for correctness checking."""
    B, T, D = x.shape

    def step(h, x_t):
        gi = x_t @ w_ih.T + b_ih
        gh = h @ w_hh.T + b_hh
        i_r, i_z, i_n = gi[:, :D], gi[:, D:2 * D], gi[:, 2 * D:]
        h_r, h_z, h_n = gh[:, :D], gh[:, D:2 * D], gh[:, 2 * D:]
        r = jax.nn.sigmoid(i_r + h_r)
        z = jax.nn.sigmoid(i_z + h_z)
        n = jnp.tanh(i_n + r * h_n)
        h_new = (1.0 - z) * n + z * h
        return h_new, h_new

    h0 = jnp.zeros((B, D), x.dtype)
    h_T, outs = jax.lax.scan(step, h0, jnp.swapaxes(x, 0, 1))
    return jnp.swapaxes(outs, 0, 1), h_T


def encoder_ref(x, params):
    h_finals = []
    layer_in = x
    for (w_ih, w_hh, b_ih, b_hh) in params:
        layer_in, h_T = gru_layer_ref(layer_in, w_ih, w_hh, b_ih, b_hh)
        h_finals.append(h_T)
    return layer_in, jnp.stack(h_finals, axis=0)


if __name__ == "__main__":
    B, T, n_dim, layers = 2, 8, 32, 2

    key = jax.random.PRNGKey(0)
    key, kx = jax.random.split(key)
    x = jax.random.normal(kx, (B, T, n_dim), jnp.float32)
    params = init_gru_params(key, n_dim, layers)

    output, hn = encoder_forward(x, params)
    output = jax.block_until_ready(output)
    hn = jax.block_until_ready(hn)

    out_ref, hn_ref = encoder_ref(x, params)
    assert output.shape == (B, T, n_dim) and hn.shape == (layers, B, n_dim)
    assert jnp.allclose(output, out_ref, atol=1e-4, rtol=1e-4), \
        float(jnp.max(jnp.abs(output - out_ref)))
    assert jnp.allclose(hn, hn_ref, atol=1e-4, rtol=1e-4), \
        float(jnp.max(jnp.abs(hn - hn_ref)))

    print("KERNEL_OK")
</pallas_src>

<mosaic_0001>
module attributes {stable_mosaic.version = 11 : i64} {
  func.func @encoder_kernel(%arg0: memref<8x2x32xf32, #tpu.memory_space<vmem>>, %arg1: memref<2x32x96xf32, #tpu.memory_space<vmem>>, %arg2: memref<2x32x96xf32, #tpu.memory_space<vmem>>, %arg3: memref<2x1x96xf32, #tpu.memory_space<vmem>>, %arg4: memref<2x1x96xf32, #tpu.memory_space<vmem>>, %arg5: memref<8x2x32xf32, #tpu.memory_space<vmem>>, %arg6: memref<2x2x32xf32, #tpu.memory_space<vmem>>, %arg7: memref<8x2x96xf32, #tpu.memory_space<vmem>>) attributes {dimension_semantics = [], scalar_prefetch = 0 : i64, scratch_operands = 1 : i64, tpu.core_type = #tpu.core_type<tc>} {
    %c0 = arith.constant 0 : index
    %c0_0 = arith.constant 0 : index
    %c0_1 = arith.constant 0 : index
    %0 = vector.load %arg1[%c0, %c0_0, %c0_1] : memref<2x32x96xf32, #tpu.memory_space<vmem>>, vector<1x32x96xf32>
    %1 = vector.shape_cast %0 : vector<1x32x96xf32> to vector<32x96xf32>
    %c0_2 = arith.constant 0 : index
    %c0_3 = arith.constant 0 : index
    %c0_4 = arith.constant 0 : index
    %2 = vector.load %arg2[%c0_2, %c0_3, %c0_4] : memref<2x32x96xf32, #tpu.memory_space<vmem>>, vector<1x32x96xf32>
    %3 = vector.shape_cast %2 : vector<1x32x96xf32> to vector<32x96xf32>
    %c0_5 = arith.constant 0 : index
    %c0_6 = arith.constant 0 : index
    %c0_7 = arith.constant 0 : index
    %4 = vector.load %arg3[%c0_5, %c0_6, %c0_7] : memref<2x1x96xf32, #tpu.memory_space<vmem>>, vector<1x1x96xf32>
    %5 = vector.shape_cast %4 : vector<1x1x96xf32> to vector<1x96xf32>
    %c0_8 = arith.constant 0 : index
    %c0_9 = arith.constant 0 : index
    %c0_10 = arith.constant 0 : index
    %6 = vector.load %arg4[%c0_8, %c0_9, %c0_10] : memref<2x1x96xf32, #tpu.memory_space<vmem>>, vector<1x1x96xf32>
    %7 = vector.shape_cast %6 : vector<1x1x96xf32> to vector<1x96xf32>
    %c0_11 = arith.constant 0 : index
    %c0_12 = arith.constant 0 : index
    %c0_13 = arith.constant 0 : index
    %8 = vector.load %arg0[%c0_11, %c0_12, %c0_13] : memref<8x2x32xf32, #tpu.memory_space<vmem>>, vector<1x2x32xf32>
    %9 = vector.shape_cast %8 : vector<1x2x32xf32> to vector<2x32xf32>
    %cst = arith.constant dense<0.000000e+00> : vector<2x96xf32>
    %10 = tpu.matmul %9, %1, %cst {dimension_numbers = #tpu.dot_dimension_numbers<[1], [0], [0], [1], [0, 0, 1, 1], [], []>} : vector<2x32xf32>, vector<32x96xf32>, vector<2x96xf32> -> vector<2x96xf32>
    %11 = vector.broadcast %5 : vector<1x96xf32> to vector<2x96xf32>
    %12 = arith.addf %10, %11 : vector<2x96xf32>
    %c0_14 = arith.constant 0 : index
    %c0_15 = arith.constant 0 : index
    %c0_16 = arith.constant 0 : index
    %13 = vector.load %arg7[%c0_14, %c0_15, %c0_16] : memref<8x2x96xf32, #tpu.memory_space<vmem>>, vector<1x2x96xf32>
    %14 = vector.shape_cast %13 : vector<1x2x96xf32> to vector<2x96xf32>
    %15 = vector.shape_cast %12 : vector<2x96xf32> to vector<1x2x96xf32>
    tpu.vector_store %arg7[%c0_14, %c0_15, %c0_16], %15 {strides = array<i32>} : memref<8x2x96xf32, #tpu.memory_space<vmem>>, vector<1x2x96xf32>,
    %c1 = arith.constant 1 : index
    %c0_17 = arith.constant 0 : index
    %c0_18 = arith.constant 0 : index
    %16 = vector.load %arg0[%c1, %c0_17, %c0_18] : memref<8x2x32xf32, #tpu.memory_space<vmem>>, vector<1x2x32xf32>
    %17 = vector.shape_cast %16 : vector<1x2x32xf32> to vector<2x32xf32>
    %cst_19 = arith.constant dense<0.000000e+00> : vector<2x96xf32>
    %18 = tpu.matmul %17, %1, %cst_19 {dimension_numbers = #tpu.dot_dimension_numbers<[1], [0], [0], [1], [0, 0, 1, 1], [], []>} : vector<2x32xf32>, vector<32x96xf32>, vector<2x96xf32> -> vector<2x96xf32>
    %19 = vector.broadcast %5 : vector<1x96xf32> to vector<2x96xf32>
    %20 = arith.addf %18, %19 : vector<2x96xf32>
    %c1_20 = arith.constant 1 : index
    %c0_21 = arith.constant 0 : index
    %c0_22 = arith.constant 0 : index
    %21 = vector.load %arg7[%c1_20, %c0_21, %c0_22] : memref<8x2x96xf32, #tpu.memory_space<vmem>>, vector<1x2x96xf32>
    %22 = vector.shape_cast %21 : vector<1x2x96xf32> to vector<2x96xf32>
    %23 = vector.shape_cast %20 : vector<2x96xf32> to vector<1x2x96xf32>
    tpu.vector_store %arg7[%c1_20, %c0_21, %c0_22], %23 {strides = array<i32>} : memref<8x2x96xf32, #tpu.memory_space<vmem>>, vector<1x2x96xf32>,
    %c2 = arith.constant 2 : index
    %c0_23 = arith.constant 0 : index
    %c0_24 = arith.constant 0 : index
    %24 = vector.load %arg0[%c2, %c0_23, %c0_24] : memref<8x2x32xf32, #tpu.memory_space<vmem>>, vector<1x2x32xf32>
    %25 = vector.shape_cast %24 : vector<1x2x32xf32> to vector<2x32xf32>
    %cst_25 = arith.constant dense<0.000000e+00> : vector<2x96xf32>
    %26 = tpu.matmul %25, %1, %cst_25 {dimension_numbers = #tpu.dot_dimension_numbers<[1], [0], [0], [1], [0, 0, 1, 1], [], []>} : vector<2x32xf32>, vector<32x96xf32>, vector<2x96xf32> -> vector<2x96xf32>
    %27 = vector.broadcast %5 : vector<1x96xf32> to vector<2x96xf32>
    %28 = arith.addf %26, %27 : vector<2x96xf32>
    %c2_26 = arith.constant 2 : index
    %c0_27 = arith.constant 0 : index
    %c0_28 = arith.constant 0 : index
    %29 = vector.load %arg7[%c2_26, %c0_27, %c0_28] : memref<8x2x96xf32, #tpu.memory_space<vmem>>, vector<1x2x96xf32>
    %30 = vector.shape_cast %29 : vector<1x2x96xf32> to vector<2x96xf32>
    %31 = vector.shape_cast %28 : vector<2x96xf32> to vector<1x2x96xf32>
    tpu.vector_store %arg7[%c2_26, %c0_27, %c0_28], %31 {strides = array<i32>} : memref<8x2x96xf32, #tpu.memory_space<vmem>>, vector<1x2x96xf32>,
    %c3 = arith.constant 3 : index
    %c0_29 = arith.constant 0 : index
    %c0_30 = arith.constant 0 : index
    %32 = vector.load %arg0[%c3, %c0_29, %c0_30] : memref<8x2x32xf32, #tpu.memory_space<vmem>>, vector<1x2x32xf32>
    %33 = vector.shape_cast %32 : vector<1x2x32xf32> to vector<2x32xf32>
    %cst_31 = arith.constant dense<0.000000e+00> : vector<2x96xf32>
    %34 = tpu.matmul %33, %1, %cst_31 {dimension_numbers = #tpu.dot_dimension_numbers<[1], [0], [0], [1], [0, 0, 1, 1], [], []>} : vector<2x32xf32>, vector<32x96xf32>, vector<2x96xf32> -> vector<2x96xf32>
    %35 = vector.broadcast %5 : vector<1x96xf32> to vector<2x96xf32>
    %36 = arith.addf %34, %35 : vector<2x96xf32>
    %c3_32 = arith.constant 3 : index
    %c0_33 = arith.constant 0 : index
    %c0_34 = arith.constant 0 : index
    %37 = vector.load %arg7[%c3_32, %c0_33, %c0_34] : memref<8x2x96xf32, #tpu.memory_space<vmem>>, vector<1x2x96xf32>
    %38 = vector.shape_cast %37 : vector<1x2x96xf32> to vector<2x96xf32>
    %39 = vector.shape_cast %36 : vector<2x96xf32> to vector<1x2x96xf32>
    tpu.vector_store %arg7[%c3_32, %c0_33, %c0_34], %39 {strides = array<i32>} : memref<8x2x96xf32, #tpu.memory_space<vmem>>, vector<1x2x96xf32>,
    %c4 = arith.constant 4 : index
    %c0_35 = arith.constant 0 : index
    %c0_36 = arith.constant 0 : index
    %40 = vector.load %arg0[%c4, %c0_35, %c0_36] : memref<8x2x32xf32, #tpu.memory_space<vmem>>, vector<1x2x32xf32>
    %41 = vector.shape_cast %40 : vector<1x2x32xf32> to vector<2x32xf32>
    %cst_37 = arith.constant dense<0.000000e+00> : vector<2x96xf32>
    %42 = tpu.matmul %41, %1, %cst_37 {dimension_numbers = #tpu.dot_dimension_numbers<[1], [0], [0], [1], [0, 0, 1, 1], [], []>} : vector<2x32xf32>, vector<32x96xf32>, vector<2x96xf32> -> vector<2x96xf32>
    %43 = vector.broadcast %5 : vector<1x96xf32> to vector<2x96xf32>
    %44 = arith.addf %42, %43 : vector<2x96xf32>
    %c4_38 = arith.constant 4 : index
    %c0_39 = arith.constant 0 : index
    %c0_40 = arith.constant 0 : index
    %45 = vector.load %arg7[%c4_38, %c0_39, %c0_40] : memref<8x2x96xf32, #tpu.memory_space<vmem>>, vector<1x2x96xf32>
    %46 = vector.shape_cast %45 : vector<1x2x96xf32> to vector<2x96xf32>
    %47 = vector.shape_cast %44 : vector<2x96xf32> to vector<1x2x96xf32>
    tpu.vector_store %arg7[%c4_38, %c0_39, %c0_40], %47 {strides = array<i32>} : memref<8x2x96xf32, #tpu.memory_space<vmem>>, vector<1x2x96xf32>,
    %c5 = arith.constant 5 : index
    %c0_41 = arith.constant 0 : index
    %c0_42 = arith.constant 0 : index
    %48 = vector.load %arg0[%c5, %c0_41, %c0_42] : memref<8x2x32xf32, #tpu.memory_space<vmem>>, vector<1x2x32xf32>
    %49 = vector.shape_cast %48 : vector<1x2x32xf32> to vector<2x32xf32>
    %cst_43 = arith.constant dense<0.000000e+00> : vector<2x96xf32>
    %50 = tpu.matmul %49, %1, %cst_43 {dimension_numbers = #tpu.dot_dimension_numbers<[1], [0], [0], [1], [0, 0, 1, 1], [], []>} : vector<2x32xf32>, vector<32x96xf32>, vector<2x96xf32> -> vector<2x96xf32>
    %51 = vector.broadcast %5 : vector<1x96xf32> to vector<2x96xf32>
    %52 = arith.addf %50, %51 : vector<2x96xf32>
    %c5_44 = arith.constant 5 : index
    %c0_45 = arith.constant 0 : index
    %c0_46 = arith.constant 0 : index
    %53 = vector.load %arg7[%c5_44, %c0_45, %c0_46] : memref<8x2x96xf32, #tpu.memory_space<vmem>>, vector<1x2x96xf32>
    %54 = vector.shape_cast %53 : vector<1x2x96xf32> to vector<2x96xf32>
    %55 = vector.shape_cast %52 : vector<2x96xf32> to vector<1x2x96xf32>
    tpu.vector_store %arg7[%c5_44, %c0_45, %c0_46], %55 {strides = array<i32>} : memref<8x2x96xf32, #tpu.memory_space<vmem>>, vector<1x2x96xf32>,
    %c6 = arith.constant 6 : index
    %c0_47 = arith.constant 0 : index
    %c0_48 = arith.constant 0 : index
    %56 = vector.load %arg0[%c6, %c0_47, %c0_48] : memref<8x2x32xf32, #tpu.memory_space<vmem>>, vector<1x2x32xf32>
    %57 = vector.shape_cast %56 : vector<1x2x32xf32> to vector<2x32xf32>
    %cst_49 = arith.constant dense<0.000000e+00> : vector<2x96xf32>
    %58 = tpu.matmul %57, %1, %cst_49 {dimension_numbers = #tpu.dot_dimension_numbers<[1], [0], [0], [1], [0, 0, 1, 1], [], []>} : vector<2x32xf32>, vector<32x96xf32>, vector<2x96xf32> -> vector<2x96xf32>
    %59 = vector.broadcast %5 : vector<1x96xf32> to vector<2x96xf32>
    %60 = arith.addf %58, %59 : vector<2x96xf32>
    %c6_50 = arith.constant 6 : index
    %c0_51 = arith.constant 0 : index
    %c0_52 = arith.constant 0 : index
    %61 = vector.load %arg7[%c6_50, %c0_51, %c0_52] : memref<8x2x96xf32, #tpu.memory_space<vmem>>, vector<1x2x96xf32>
    %62 = vector.shape_cast %61 : vector<1x2x96xf32> to vector<2x96xf32>
    %63 = vector.shape_cast %60 : vector<2x96xf32> to vector<1x2x96xf32>
    tpu.vector_store %arg7[%c6_50, %c0_51, %c0_52], %63 {strides = array<i32>} : memref<8x2x96xf32, #tpu.memory_space<vmem>>, vector<1x2x96xf32>,
    %c7 = arith.constant 7 : index
    %c0_53 = arith.constant 0 : index
    %c0_54 = arith.constant 0 : index
    %64 = vector.load %arg0[%c7, %c0_53, %c0_54] : memref<8x2x32xf32, #tpu.memory_space<vmem>>, vector<1x2x32xf32>
    %65 = vector.shape_cast %64 : vector<1x2x32xf32> to vector<2x32xf32>
    %cst_55 = arith.constant dense<0.000000e+00> : vector<2x96xf32>
    %66 = tpu.matmul %65, %1, %cst_55 {dimension_numbers = #tpu.dot_dimension_numbers<[1], [0], [0], [1], [0, 0, 1, 1], [], []>} : vector<2x32xf32>, vector<32x96xf32>, vector<2x96xf32> -> vector<2x96xf32>
    %67 = vector.broadcast %5 : vector<1x96xf32> to vector<2x96xf32>
    %68 = arith.addf %66, %67 : vector<2x96xf32>
    %c7_56 = arith.constant 7 : index
    %c0_57 = arith.constant 0 : index
    %c0_58 = arith.constant 0 : index
    %69 = vector.load %arg7[%c7_56, %c0_57, %c0_58] : memref<8x2x96xf32, #tpu.memory_space<vmem>>, vector<1x2x96xf32>
    %70 = vector.shape_cast %69 : vector<1x2x96xf32> to vector<2x96xf32>
    %71 = vector.shape_cast %68 : vector<2x96xf32> to vector<1x2x96xf32>
    tpu.vector_store %arg7[%c7_56, %c0_57, %c0_58], %71 {strides = array<i32>} : memref<8x2x96xf32, #tpu.memory_space<vmem>>, vector<1x2x96xf32>,
    %cst_59 = arith.constant 0.000000e+00 : f32
    %72 = vector.broadcast %cst_59 : f32 to vector<2x32xf32>
    %c0_i32 = arith.constant 0 : i32
    %c8_i32 = arith.constant 8 : i32
    %73 = arith.addi %c0_i32, %c8_i32 : i32
    %c1_i32 = arith.constant 1 : i32
    %74 = scf.for %arg8 = %c0_i32 to %73 step %c1_i32 iter_args(%arg9 = %72) -> (vector<2x32xf32>)  : i32 {
      %156 = arith.index_cast %arg8 : i32 to index
      %c0_140 = arith.constant 0 : index
      %c0_141 = arith.constant 0 : index
      %157 = vector.load %arg7[%156, %c0_140, %c0_141] : memref<8x2x96xf32, #tpu.memory_space<vmem>>, vector<1x2x96xf32>
      %158 = vector.shape_cast %157 : vector<1x2x96xf32> to vector<2x96xf32>
      %cst_142 = arith.constant dense<0.000000e+00> : vector<2x96xf32>
      %159 = tpu.matmul %arg9, %3, %cst_142 {dimension_numbers = #tpu.dot_dimension_numbers<[1], [0], [0], [1], [0, 0, 1, 1], [], []>} : vector<2x32xf32>, vector<32x96xf32>, vector<2x96xf32> -> vector<2x96xf32>
      %160 = vector.broadcast %7 : vector<1x96xf32> to vector<2x96xf32>
      %161 = arith.addf %159, %160 : vector<2x96xf32>
      %162 = vector.extract_strided_slice %158 {offsets = [0, 0], sizes = [2, 32], strides = [1, 1]} : vector<2x96xf32> to vector<2x32xf32>
      %163 = vector.extract_strided_slice %161 {offsets = [0, 0], sizes = [2, 32], strides = [1, 1]} : vector<2x96xf32> to vector<2x32xf32>
      %164 = arith.addf %162, %163 : vector<2x32xf32>
      %165 = arith.negf %164 : vector<2x32xf32>
      %166 = math.exp %165 : vector<2x32xf32>
      %cst_143 = arith.constant 1.000000e+00 : f32
      %167 = vector.broadcast %cst_143 : f32 to vector<2x32xf32>
      %168 = arith.addf %167, %166 : vector<2x32xf32>
      %169 = arith.divf %167, %168 : vector<2x32xf32>
      %170 = vector.extract_strided_slice %158 {offsets = [0, 32], sizes = [2, 32], strides = [1, 1]} : vector<2x96xf32> to vector<2x32xf32>
      %171 = vector.extract_strided_slice %161 {offsets = [0, 32], sizes = [2, 32], strides = [1, 1]} : vector<2x96xf32> to vector<2x32xf32>
      %172 = arith.addf %170, %171 : vector<2x32xf32>
      %173 = arith.negf %172 : vector<2x32xf32>
      %174 = math.exp %173 : vector<2x32xf32>
      %cst_144 = arith.constant 1.000000e+00 : f32
      %175 = vector.broadcast %cst_144 : f32 to vector<2x32xf32>
      %176 = arith.addf %175, %174 : vector<2x32xf32>
      %177 = arith.divf %175, %176 : vector<2x32xf32>
      %178 = vector.extract_strided_slice %158 {offsets = [0, 64], sizes = [2, 32], strides = [1, 1]} : vector<2x96xf32> to vector<2x32xf32>
      %179 = vector.extract_strided_slice %161 {offsets = [0, 64], sizes = [2, 32], strides = [1, 1]} : vector<2x96xf32> to vector<2x32xf32>
      %180 = arith.mulf %169, %179 : vector<2x32xf32>
      %181 = arith.addf %178, %180 : vector<2x32xf32>
      %182 = math.tanh %181 : vector<2x32xf32>
      %cst_145 = arith.constant 1.000000e+00 : f32
      %183 = vector.broadcast %cst_145 : f32 to vector<2x32xf32>
      %184 = arith.subf %183, %177 : vector<2x32xf32>
      %185 = arith.mulf %184, %182 : vector<2x32xf32>
      %186 = arith.mulf %177, %arg9 : vector<2x32xf32>
      %187 = arith.addf %185, %186 : vector<2x32xf32>
      %188 = arith.index_cast %arg8 : i32 to index
      %c0_146 = arith.constant 0 : index
      %c0_147 = arith.constant 0 : index
      %189 = vector.load %arg5[%188, %c0_146, %c0_147] : memref<8x2x32xf32, #tpu.memory_space<vmem>>, vector<1x2x32xf32>
      %190 = vector.shape_cast %189 : vector<1x2x32xf32> to vector<2x32xf32>
      %191 = vector.shape_cast %187 : vector<2x32xf32> to vector<1x2x32xf32>
      tpu.vector_store %arg5[%188, %c0_146, %c0_147], %191 {strides = array<i32>} : memref<8x2x32xf32, #tpu.memory_space<vmem>>, vector<1x2x32xf32>,
      scf.yield %187 : vector<2x32xf32>
    }
    %c8_i32_60 = arith.constant 8 : i32
    %c0_61 = arith.constant 0 : index
    %c0_62 = arith.constant 0 : index
    %c0_63 = arith.constant 0 : index
    %75 = vector.load %arg6[%c0_61, %c0_62, %c0_63] : memref<2x2x32xf32, #tpu.memory_space<vmem>>, vector<1x2x32xf32>
    %76 = vector.shape_cast %75 : vector<1x2x32xf32> to vector<2x32xf32>
    %77 = vector.shape_cast %74 : vector<2x32xf32> to vector<1x2x32xf32>
    tpu.vector_store %arg6[%c0_61, %c0_62, %c0_63], %77 {strides = array<i32>} : memref<2x2x32xf32, #tpu.memory_space<vmem>>, vector<1x2x32xf32>,
    %c1_64 = arith.constant 1 : index
    %c0_65 = arith.constant 0 : index
    %c0_66 = arith.constant 0 : index
    %78 = vector.load %arg1[%c1_64, %c0_65, %c0_66] : memref<2x32x96xf32, #tpu.memory_space<vmem>>, vector<1x32x96xf32>
    %79 = vector.shape_cast %78 : vector<1x32x96xf32> to vector<32x96xf32>
    %c1_67 = arith.constant 1 : index
    %c0_68 = arith.constant 0 : index
    %c0_69 = arith.constant 0 : index
    %80 = vector.load %arg2[%c1_67, %c0_68, %c0_69] : memref<2x32x96xf32, #tpu.memory_space<vmem>>, vector<1x32x96xf32>
    %81 = vector.shape_cast %80 : vector<1x32x96xf32> to vector<32x96xf32>
    %c1_70 = arith.constant 1 : index
    %c0_71 = arith.constant 0 : index
    %c0_72 = arith.constant 0 : index
    %82 = vector.load %arg3[%c1_70, %c0_71, %c0_72] : memref<2x1x96xf32, #tpu.memory_space<vmem>>, vector<1x1x96xf32>
    %83 = vector.shape_cast %82 : vector<1x1x96xf32> to vector<1x96xf32>
    %c1_73 = arith.constant 1 : index
    %c0_74 = arith.constant 0 : index
    %c0_75 = arith.constant 0 : index
    %84 = vector.load %arg4[%c1_73, %c0_74, %c0_75] : memref<2x1x96xf32, #tpu.memory_space<vmem>>, vector<1x1x96xf32>
    %85 = vector.shape_cast %84 : vector<1x1x96xf32> to vector<1x96xf32>
    %c0_76 = arith.constant 0 : index
    %c0_77 = arith.constant 0 : index
    %c0_78 = arith.constant 0 : index
    %86 = vector.load %arg5[%c0_76, %c0_77, %c0_78] : memref<8x2x32xf32, #tpu.memory_space<vmem>>, vector<1x2x32xf32>
    %87 = vector.shape_cast %86 : vector<1x2x32xf32> to vector<2x32xf32>
    %cst_79 = arith.constant dense<0.000000e+00> : vector<2x96xf32>
    %88 = tpu.matmul %87, %79, %cst_79 {dimension_numbers = #tpu.dot_dimension_numbers<[1], [0], [0], [1], [0, 0, 1, 1], [], []>} : vector<2x32xf32>, vector<32x96xf32>, vector<2x96xf32> -> vector<2x96xf32>
    %89 = vector.broadcast %83 : vector<1x96xf32> to vector<2x96xf32>
    %90 = arith.addf %88, %89 : vector<2x96xf32>
    %c0_80 = arith.constant 0 : index
    %c0_81 = arith.constant 0 : index
    %c0_82 = arith.constant 0 : index
    %91 = vector.load %arg7[%c0_80, %c0_81, %c0_82] : memref<8x2x96xf32, #tpu.memory_space<vmem>>, vector<1x2x96xf32>
    %92 = vector.shape_cast %91 : vector<1x2x96xf32> to vector<2x96xf32>
    %93 = vector.shape_cast %90 : vector<2x96xf32> to vector<1x2x96xf32>
    tpu.vector_store %arg7[%c0_80, %c0_81, %c0_82], %93 {strides = array<i32>} : memref<8x2x96xf32, #tpu.memory_space<vmem>>, vector<1x2x96xf32>,
    %c1_83 = arith.constant 1 : index
    %c0_84 = arith.constant 0 : index
    %c0_85 = arith.constant 0 : index
    %94 = vector.load %arg5[%c1_83, %c0_84, %c0_85] : memref<8x2x32xf32, #tpu.memory_space<vmem>>, vector<1x2x32xf32>
    %95 = vector.shape_cast %94 : vector<1x2x32xf32> to vector<2x32xf32>
    %cst_86 = arith.constant dense<0.000000e+00> : vector<2x96xf32>
    %96 = tpu.matmul %95, %79, %cst_86 {dimension_numbers = #tpu.dot_dimension_numbers<[1], [0], [0], [1], [0, 0, 1, 1], [], []>} : vector<2x32xf32>, vector<32x96xf32>, vector<2x96xf32> -> vector<2x96xf32>
    %97 = vector.broadcast %83 : vector<1x96xf32> to vector<2x96xf32>
    %98 = arith.addf %96, %97 : vector<2x96xf32>
    %c1_87 = arith.constant 1 : index
    %c0_88 = arith.constant 0 : index
    %c0_89 = arith.constant 0 : index
    %99 = vector.load %arg7[%c1_87, %c0_88, %c0_89] : memref<8x2x96xf32, #tpu.memory_space<vmem>>, vector<1x2x96xf32>
    %100 = vector.shape_cast %99 : vector<1x2x96xf32> to vector<2x96xf32>
    %101 = vector.shape_cast %98 : vector<2x96xf32> to vector<1x2x96xf32>
    tpu.vector_store %arg7[%c1_87, %c0_88, %c0_89], %101 {strides = array<i32>} : memref<8x2x96xf32, #tpu.memory_space<vmem>>, vector<1x2x96xf32>,
    %c2_90 = arith.constant 2 : index
    %c0_91 = arith.constant 0 : index
    %c0_92 = arith.constant 0 : index
    %102 = vector.load %arg5[%c2_90, %c0_91, %c0_92] : memref<8x2x32xf32, #tpu.memory_space<vmem>>, vector<1x2x32xf32>
    %103 = vector.shape_cast %102 : vector<1x2x32xf32> to vector<2x32xf32>
    %cst_93 = arith.constant dense<0.000000e+00> : vector<2x96xf32>
    %104 = tpu.matmul %103, %79, %cst_93 {dimension_numbers = #tpu.dot_dimension_numbers<[1], [0], [0], [1], [0, 0, 1, 1], [], []>} : vector<2x32xf32>, vector<32x96xf32>, vector<2x96xf32> -> vector<2x96xf32>
    %105 = vector.broadcast %83 : vector<1x96xf32> to vector<2x96xf32>
    %106 = arith.addf %104, %105 : vector<2x96xf32>
    %c2_94 = arith.constant 2 : index
    %c0_95 = arith.constant 0 : index
    %c0_96 = arith.constant 0 : index
    %107 = vector.load %arg7[%c2_94, %c0_95, %c0_96] : memref<8x2x96xf32, #tpu.memory_space<vmem>>, vector<1x2x96xf32>
    %108 = vector.shape_cast %107 : vector<1x2x96xf32> to vector<2x96xf32>
    %109 = vector.shape_cast %106 : vector<2x96xf32> to vector<1x2x96xf32>
    tpu.vector_store %arg7[%c2_94, %c0_95, %c0_96], %109 {strides = array<i32>} : memref<8x2x96xf32, #tpu.memory_space<vmem>>, vector<1x2x96xf32>,
    %c3_97 = arith.constant 3 : index
    %c0_98 = arith.constant 0 : index
    %c0_99 = arith.constant 0 : index
    %110 = vector.load %arg5[%c3_97, %c0_98, %c0_99] : memref<8x2x32xf32, #tpu.memory_space<vmem>>, vector<1x2x32xf32>
    %111 = vector.shape_cast %110 : vector<1x2x32xf32> to vector<2x32xf32>
    %cst_100 = arith.constant dense<0.000000e+00> : vector<2x96xf32>
    %112 = tpu.matmul %111, %79, %cst_100 {dimension_numbers = #tpu.dot_dimension_numbers<[1], [0], [0], [1], [0, 0, 1, 1], [], []>} : vector<2x32xf32>, vector<32x96xf32>, vector<2x96xf32> -> vector<2x96xf32>
    %113 = vector.broadcast %83 : vector<1x96xf32> to vector<2x96xf32>
    %114 = arith.addf %112, %113 : vector<2x96xf32>
    %c3_101 = arith.constant 3 : index
    %c0_102 = arith.constant 0 : index
    %c0_103 = arith.constant 0 : index
    %115 = vector.load %arg7[%c3_101, %c0_102, %c0_103] : memref<8x2x96xf32, #tpu.memory_space<vmem>>, vector<1x2x96xf32>
    %116 = vector.shape_cast %115 : vector<1x2x96xf32> to vector<2x96xf32>
    %117 = vector.shape_cast %114 : vector<2x96xf32> to vector<1x2x96xf32>
    tpu.vector_store %arg7[%c3_101, %c0_102, %c0_103], %117 {strides = array<i32>} : memref<8x2x96xf32, #tpu.memory_space<vmem>>, vector<1x2x96xf32>,
    %c4_104 = arith.constant 4 : index
    %c0_105 = arith.constant 0 : index
    %c0_106 = arith.constant 0 : index
    %118 = vector.load %arg5[%c4_104, %c0_105, %c0_106] : memref<8x2x32xf32, #tpu.memory_space<vmem>>, vector<1x2x32xf32>
    %119 = vector.shape_cast %118 : vector<1x2x32xf32> to vector<2x32xf32>
    %cst_107 = arith.constant dense<0.000000e+00> : vector<2x96xf32>
    %120 = tpu.matmul %119, %79, %cst_107 {dimension_numbers = #tpu.dot_dimension_numbers<[1], [0], [0], [1], [0, 0, 1, 1], [], []>} : vector<2x32xf32>, vector<32x96xf32>, vector<2x96xf32> -> vector<2x96xf32>
    %121 = vector.broadcast %83 : vector<1x96xf32> to vector<2x96xf32>
    %122 = arith.addf %120, %121 : vector<2x96xf32>
    %c4_108 = arith.constant 4 : index
    %c0_109 = arith.constant 0 : index
    %c0_110 = arith.constant 0 : index
    %123 = vector.load %arg7[%c4_108, %c0_109, %c0_110] : memref<8x2x96xf32, #tpu.memory_space<vmem>>, vector<1x2x96xf32>
    %124 = vector.shape_cast %123 : vector<1x2x96xf32> to vector<2x96xf32>
    %125 = vector.shape_cast %122 : vector<2x96xf32> to vector<1x2x96xf32>
    tpu.vector_store %arg7[%c4_108, %c0_109, %c0_110], %125 {strides = array<i32>} : memref<8x2x96xf32, #tpu.memory_space<vmem>>, vector<1x2x96xf32>,
    %c5_111 = arith.constant 5 : index
    %c0_112 = arith.constant 0 : index
    %c0_113 = arith.constant 0 : index
    %126 = vector.load %arg5[%c5_111, %c0_112, %c0_113] : memref<8x2x32xf32, #tpu.memory_space<vmem>>, vector<1x2x32xf32>
    %127 = vector.shape_cast %126 : vector<1x2x32xf32> to vector<2x32xf32>
    %cst_114 = arith.constant dense<0.000000e+00> : vector<2x96xf32>
    %128 = tpu.matmul %127, %79, %cst_114 {dimension_numbers = #tpu.dot_dimension_numbers<[1], [0], [0], [1], [0, 0, 1, 1], [], []>} : vector<2x32xf32>, vector<32x96xf32>, vector<2x96xf32> -> vector<2x96xf32>
    %129 = vector.broadcast %83 : vector<1x96xf32> to vector<2x96xf32>
    %130 = arith.addf %128, %129 : vector<2x96xf32>
    %c5_115 = arith.constant 5 : index
    %c0_116 = arith.constant 0 : index
    %c0_117 = arith.constant 0 : index
    %131 = vector.load %arg7[%c5_115, %c0_116, %c0_117] : memref<8x2x96xf32, #tpu.memory_space<vmem>>, vector<1x2x96xf32>
    %132 = vector.shape_cast %131 : vector<1x2x96xf32> to vector<2x96xf32>
    %133 = vector.shape_cast %130 : vector<2x96xf32> to vector<1x2x96xf32>
    tpu.vector_store %arg7[%c5_115, %c0_116, %c0_117], %133 {strides = array<i32>} : memref<8x2x96xf32, #tpu.memory_space<vmem>>, vector<1x2x96xf32>,
    %c6_118 = arith.constant 6 : index
    %c0_119 = arith.constant 0 : index
    %c0_120 = arith.constant 0 : index
    %134 = vector.load %arg5[%c6_118, %c0_119, %c0_120] : memref<8x2x32xf32, #tpu.memory_space<vmem>>, vector<1x2x32xf32>
    %135 = vector.shape_cast %134 : vector<1x2x32xf32> to vector<2x32xf32>
    %cst_121 = arith.constant dense<0.000000e+00> : vector<2x96xf32>
    %136 = tpu.matmul %135, %79, %cst_121 {dimension_numbers = #tpu.dot_dimension_numbers<[1], [0], [0], [1], [0, 0, 1, 1], [], []>} : vector<2x32xf32>, vector<32x96xf32>, vector<2x96xf32> -> vector<2x96xf32>
    %137 = vector.broadcast %83 : vector<1x96xf32> to vector<2x96xf32>
    %138 = arith.addf %136, %137 : vector<2x96xf32>
    %c6_122 = arith.constant 6 : index
    %c0_123 = arith.constant 0 : index
    %c0_124 = arith.constant 0 : index
    %139 = vector.load %arg7[%c6_122, %c0_123, %c0_124] : memref<8x2x96xf32, #tpu.memory_space<vmem>>, vector<1x2x96xf32>
    %140 = vector.shape_cast %139 : vector<1x2x96xf32> to vector<2x96xf32>
    %141 = vector.shape_cast %138 : vector<2x96xf32> to vector<1x2x96xf32>
    tpu.vector_store %arg7[%c6_122, %c0_123, %c0_124], %141 {strides = array<i32>} : memref<8x2x96xf32, #tpu.memory_space<vmem>>, vector<1x2x96xf32>,
    %c7_125 = arith.constant 7 : index
    %c0_126 = arith.constant 0 : index
    %c0_127 = arith.constant 0 : index
    %142 = vector.load %arg5[%c7_125, %c0_126, %c0_127] : memref<8x2x32xf32, #tpu.memory_space<vmem>>, vector<1x2x32xf32>
    %143 = vector.shape_cast %142 : vector<1x2x32xf32> to vector<2x32xf32>
    %cst_128 = arith.constant dense<0.000000e+00> : vector<2x96xf32>
    %144 = tpu.matmul %143, %79, %cst_128 {dimension_numbers = #tpu.dot_dimension_numbers<[1], [0], [0], [1], [0, 0, 1, 1], [], []>} : vector<2x32xf32>, vector<32x96xf32>, vector<2x96xf32> -> vector<2x96xf32>
    %145 = vector.broadcast %83 : vector<1x96xf32> to vector<2x96xf32>
    %146 = arith.addf %144, %145 : vector<2x96xf32>
    %c7_129 = arith.constant 7 : index
    %c0_130 = arith.constant 0 : index
    %c0_131 = arith.constant 0 : index
    %147 = vector.load %arg7[%c7_129, %c0_130, %c0_131] : memref<8x2x96xf32, #tpu.memory_space<vmem>>, vector<1x2x96xf32>
    %148 = vector.shape_cast %147 : vector<1x2x96xf32> to vector<2x96xf32>
    %149 = vector.shape_cast %146 : vector<2x96xf32> to vector<1x2x96xf32>
    tpu.vector_store %arg7[%c7_129, %c0_130, %c0_131], %149 {strides = array<i32>} : memref<8x2x96xf32, #tpu.memory_space<vmem>>, vector<1x2x96xf32>,
    %cst_132 = arith.constant 0.000000e+00 : f32
    %150 = vector.broadcast %cst_132 : f32 to vector<2x32xf32>
    %c0_i32_133 = arith.constant 0 : i32
    %c8_i32_134 = arith.constant 8 : i32
    %151 = arith.addi %c0_i32_133, %c8_i32_134 : i32
    %c1_i32_135 = arith.constant 1 : i32
    %152 = scf.for %arg8 = %c0_i32_133 to %151 step %c1_i32_135 iter_args(%arg9 = %150) -> (vector<2x32xf32>)  : i32 {
      %156 = arith.index_cast %arg8 : i32 to index
      %c0_140 = arith.constant 0 : index
      %c0_141 = arith.constant 0 : index
      %157 = vector.load %arg7[%156, %c0_140, %c0_141] : memref<8x2x96xf32, #tpu.memory_space<vmem>>, vector<1x2x96xf32>
      %158 = vector.shape_cast %157 : vector<1x2x96xf32> to vector<2x96xf32>
      %cst_142 = arith.constant dense<0.000000e+00> : vector<2x96xf32>
      %159 = tpu.matmul %arg9, %81, %cst_142 {dimension_numbers = #tpu.dot_dimension_numbers<[1], [0], [0], [1], [0, 0, 1, 1], [], []>} : vector<2x32xf32>, vector<32x96xf32>, vector<2x96xf32> -> vector<2x96xf32>
      %160 = vector.broadcast %85 : vector<1x96xf32> to vector<2x96xf32>
      %161 = arith.addf %159, %160 : vector<2x96xf32>
      %162 = vector.extract_strided_slice %158 {offsets = [0, 0], sizes = [2, 32], strides = [1, 1]} : vector<2x96xf32> to vector<2x32xf32>
      %163 = vector.extract_strided_slice %161 {offsets = [0, 0], sizes = [2, 32], strides = [1, 1]} : vector<2x96xf32> to vector<2x32xf32>
      %164 = arith.addf %162, %163 : vector<2x32xf32>
      %165 = arith.negf %164 : vector<2x32xf32>
      %166 = math.exp %165 : vector<2x32xf32>
      %cst_143 = arith.constant 1.000000e+00 : f32
      %167 = vector.broadcast %cst_143 : f32 to vector<2x32xf32>
      %168 = arith.addf %167, %166 : vector<2x32xf32>
      %169 = arith.divf %167, %168 : vector<2x32xf32>
      %170 = vector.extract_strided_slice %158 {offsets = [0, 32], sizes = [2, 32], strides = [1, 1]} : vector<2x96xf32> to vector<2x32xf32>
      %171 = vector.extract_strided_slice %161 {offsets = [0, 32], sizes = [2, 32], strides = [1, 1]} : vector<2x96xf32> to vector<2x32xf32>
      %172 = arith.addf %170, %171 : vector<2x32xf32>
      %173 = arith.negf %172 : vector<2x32xf32>
      %174 = math.exp %173 : vector<2x32xf32>
      %cst_144 = arith.constant 1.000000e+00 : f32
      %175 = vector.broadcast %cst_144 : f32 to vector<2x32xf32>
      %176 = arith.addf %175, %174 : vector<2x32xf32>
      %177 = arith.divf %175, %176 : vector<2x32xf32>
      %178 = vector.extract_strided_slice %158 {offsets = [0, 64], sizes = [2, 32], strides = [1, 1]} : vector<2x96xf32> to vector<2x32xf32>
      %179 = vector.extract_strided_slice %161 {offsets = [0, 64], sizes = [2, 32], strides = [1, 1]} : vector<2x96xf32> to vector<2x32xf32>
      %180 = arith.mulf %169, %179 : vector<2x32xf32>
      %181 = arith.addf %178, %180 : vector<2x32xf32>
      %182 = math.tanh %181 : vector<2x32xf32>
      %cst_145 = arith.constant 1.000000e+00 : f32
      %183 = vector.broadcast %cst_145 : f32 to vector<2x32xf32>
      %184 = arith.subf %183, %177 : vector<2x32xf32>
      %185 = arith.mulf %184, %182 : vector<2x32xf32>
      %186 = arith.mulf %177, %arg9 : vector<2x32xf32>
      %187 = arith.addf %185, %186 : vector<2x32xf32>
      %188 = arith.index_cast %arg8 : i32 to index
      %c0_146 = arith.constant 0 : index
      %c0_147 = arith.constant 0 : index
      %189 = vector.load %arg5[%188, %c0_146, %c0_147] : memref<8x2x32xf32, #tpu.memory_space<vmem>>, vector<1x2x32xf32>
      %190 = vector.shape_cast %189 : vector<1x2x32xf32> to vector<2x32xf32>
      %191 = vector.shape_cast %187 : vector<2x32xf32> to vector<1x2x32xf32>
      tpu.vector_store %arg5[%188, %c0_146, %c0_147], %191 {strides = array<i32>} : memref<8x2x32xf32, #tpu.memory_space<vmem>>, vector<1x2x32xf32>,
      scf.yield %187 : vector<2x32xf32>
    }
    %c8_i32_136 = arith.constant 8 : i32
    %c1_137 = arith.constant 1 : index
    %c0_138 = arith.constant 0 : index
    %c0_139 = arith.constant 0 : index
    %153 = vector.load %arg6[%c1_137, %c0_138, %c0_139] : memref<2x2x32xf32, #tpu.memory_space<vmem>>, vector<1x2x32xf32>
    %154 = vector.shape_cast %153 : vector<1x2x32xf32> to vector<2x32xf32>
    %155 = vector.shape_cast %152 : vector<2x32xf32> to vector<1x2x32xf32>
    tpu.vector_store %arg6[%c1_137, %c0_138, %c0_139], %155 {strides = array<i32>} : memref<2x2x32xf32, #tpu.memory_space<vmem>>, vector<1x2x32xf32>,
    return
  }
}

</mosaic_0001>

<llo_original>
// kernel: tpu_custom_call.1
$region0: #{tpu_custom_call.1}
  #allocation0 [shape = 'u32[]', space=smem, size = 0x4, offset = 0x4, fixed_abs, tag = 'smem constant byte address 0x4 - core index']
  #allocation1 [shape = 'u32[144,128]{1,0:T(1,128)}', space=vmem, size = 0x12000, scoped, tag = 'internal scratch']
  #allocation2 [shape = 'f32[8,2,96]{2,1,0:T(2,128)}', space=vmem, size = 0x2000, scoped, tag = 'scratch operand']
  %s0 = inlined_call_operand.hbm [shape: f32[8,2,32], index: 0, kind: input, shape index: {}]
  %s1 = inlined_call_operand.hbm [shape: f32[2,32,96], index: 1, kind: input, shape index: {}]
  %s2 = inlined_call_operand.hbm [shape: f32[2,32,96], index: 2, kind: input, shape index: {}]
  %s3 = inlined_call_operand.vmem [shape: f32[2,1,96], index: 3, kind: input, shape index: {}]
  %s4 = inlined_call_operand.vmem [shape: f32[2,1,96], index: 4, kind: input, shape index: {}]
  %s5 = inlined_call_operand.hbm [shape: f32[8,2,32], index: 5, kind: output, shape index: {0}]
  %s6 = inlined_call_operand.hbm [shape: f32[2,2,32], index: 6, kind: output, shape index: {1}]
  %7 = xla_tuple %s5, %s6
  %s8 = sld [smem:[#allocation0]]
  $region64: #{tpu_custom_call.1} parent=0
    _
  %s10 = ssub.s32 1, %s8
  %s11 = scalar_select 0, %s10, %s8
  $region1: #{tpu_custom_call.1} parent=0
    #allocation3 [shape = 'u8[8192]{0}', space=vmem, size = 0x2000, scoped, tag = 'input window, operand 0, single buffered']
    #allocation4 [shape = 's32[1]{0}', space=sflag, size = 0x4, scoped, tag = 'scoped memory for tpu_custom_call.1']
    #allocation5 [shape = 's32[1]{0}', space=sflag, size = 0x4, scoped, tag = 'scoped memory for tpu_custom_call.1']
    #allocation6 [shape = 'u8[32768]{0}', space=vmem, size = 0x8000, scoped, tag = 'input window, operand 1, single buffered']
    #allocation7 [shape = 's32[1]{0}', space=sflag, size = 0x4, scoped, tag = 'scoped memory for tpu_custom_call.1']
    #allocation8 [shape = 'u8[32768]{0}', space=vmem, size = 0x8000, scoped, tag = 'input window, operand 2, single buffered']
    #allocation9 [shape = 'u8[8192]{0}', space=vmem, size = 0x2000, scoped, tag = 'output window, operand 0, single buffered']
    #allocation10 [shape = 'u8[2048]{0}', space=vmem, size = 0x800, scoped, tag = 'output window, operand 1, single buffered']
    #allocation11 [shape = 's32[1]{0}', space=sflag, size = 0x4, scoped, tag = 'scoped memory for tpu_custom_call.1']
    %12 = vsyncpa [#allocation4], 0
    %13 = vsyncpa [#allocation7], 0
    %14 = vsyncpa [#allocation5], 0
    %15 = vsyncpa [#allocation11], 0
    // Predicated region
    $region2: #{tpu_custom_call.1} parent=1 // pred_check
      _
    $region3: #{tpu_custom_call.1} parent=1 // pred_check_branch
      %17 = sbr.rel (0) target = $region5
    $region4: #{tpu_custom_call.1} parent=1 // pred_region
      %s19 = ssub.s32 256, 256
      %20 = vsyncadd [#allocation4], %s19
      %s21 = sshll.u32 [#allocation3], 4
      %s22 = int_to_ptr.vmem [resolvable:$true] %s21
      %27 = dma.hbm_to_vmem [thread:$0]  %s0, 256, %s22, [#allocation4], 32, 32, 2
    $region5: #{tpu_custom_call.1} parent=1 // pred_fallthru
      _
    // Predicated region
    $region6: #{tpu_custom_call.1} parent=1 // pred_check
      _
    $region7: #{tpu_custom_call.1} parent=1 // pred_check_branch
      %29 = sbr.rel (0) target = $region9
    $region8: #{tpu_custom_call.1} parent=1 // pred_region
      %s31 = ssub.s32 1024, 1024
      %32 = vsyncadd [#allocation7], %s31
      %s33 = sshll.u32 [#allocation6], 4
      %s34 = int_to_ptr.vmem [resolvable:$true] %s33
      %39 = dma.hbm_to_vmem [thread:$0]  %s1, 1024, %s34, [#allocation7], 128, 128, 8
    $region9: #{tpu_custom_call.1} parent=1 // pred_fallthru
      _
    // Predicated region
    $region10: #{tpu_custom_call.1} parent=1 // pred_check
      _
    $region11: #{tpu_custom_call.1} parent=1 // pred_check_branch
      %41 = sbr.rel (0) target = $region13
    $region12: #{tpu_custom_call.1} parent=1 // pred_region
      %s43 = ssub.s32 1024, 1024
      %44 = vsyncadd [#allocation7], %s43
      %s45 = sshll.u32 [#allocation8], 4
      %s46 = int_to_ptr.vmem [resolvable:$true] %s45
      %51 = dma.hbm_to_vmem [thread:$0]  %s2, 1024, %s46, [#allocation7], 128, 128, 8
    $region13: #{tpu_custom_call.1} parent=1 // pred_fallthru
      _
    // Predicated region
    $region14: #{tpu_custom_call.1} parent=1 // pred_check
      _
    $region15: #{tpu_custom_call.1} parent=1 // pred_check_branch
      %53 = sbr.rel (0) target = $region17
    $region16: #{tpu_custom_call.1} parent=1 // pred_region
      _
    $region17: #{tpu_custom_call.1} parent=1 // pred_fallthru
      _
    // Predicated region
    $region18: #{tpu_custom_call.1} parent=1 // pred_check
      _
    $region19: #{tpu_custom_call.1} parent=1 // pred_check_branch
      %55 = sbr.rel (0) target = $region21
    $region20: #{tpu_custom_call.1} parent=1 // pred_region
      _
    $region21: #{tpu_custom_call.1} parent=1 // pred_fallthru
      _
    // Predicated region
    $region22: #{tpu_custom_call.1} parent=1 // pred_check
      _
    $region23: #{tpu_custom_call.1} parent=1 // pred_check_branch
      %57 = sbr.rel (0) target = $region25
    $region24: #{tpu_custom_call.1} parent=1 // pred_region
      %58 = dma.done [#allocation4], 256
    $region25: #{tpu_custom_call.1} parent=1 // pred_fallthru
      _
    // Predicated region
    $region26: #{tpu_custom_call.1} parent=1 // pred_check
      _
    $region27: #{tpu_custom_call.1} parent=1 // pred_check_branch
      %60 = sbr.rel (0) target = $region29
    $region28: #{tpu_custom_call.1} parent=1 // pred_region
      %61 = dma.done [#allocation7], 1024
    $region29: #{tpu_custom_call.1} parent=1 // pred_fallthru
      _
    // Predicated region
    $region30: #{tpu_custom_call.1} parent=1 // pred_check
      _
    $region31: #{tpu_custom_call.1} parent=1 // pred_check_branch
      %63 = sbr.rel (0) target = $region33
    $region32: #{tpu_custom_call.1} parent=1 // pred_region
      %64 = dma.done [#allocation7], 1024
    $region33: #{tpu_custom_call.1} parent=1 // pred_fallthru
      _
    %v65 = vld [vmem:[#allocation6] sm:$0xff]
    %v66 = vld [vmem:[#allocation6 + $0x8] sm:$0xff]
    %v67 = vld [vmem:[#allocation6 + $0x10] sm:$0xff]
    %v68 = vld [vmem:[#allocation6 + $0x18] sm:$0xff]
    %v69 = vld [vmem:[#allocation8] sm:$0xff]
    %v70 = vld [vmem:[#allocation8 + $0x8] sm:$0xff]
    %v71 = vld [vmem:[#allocation8 + $0x10] sm:$0xff]
    %v72 = vld [vmem:[#allocation8 + $0x18] sm:$0xff]
    %v73 = vld [vmem:[%s3] sm:$0x1]
    %v74 = vld [vmem:[%s4] sm:$0x1]
    %v75 = vld [vmem:[#allocation3] sm:$0x3]
    %v77 = vlaneseq
    %v78 = vshrl.u32 %v77, 7
    %v79 = vsub.s32 0, %v78
    %v80 = vrot.slane %v73, %v79
    %vm82 = vcmask 261120
    %v84 = vsel %vm82, %v75, 0
    %86 = vmatprep.subr.mxu0 0.0
    %87 = vmatpush1.msra.mxu0 %v65
    %88 = vmatprep.subr.mxu0 0.0
    %89 = vmatpush1.msra.mxu0 %v66
    %90 = vmatprep.subr.mxu0 0.0
    %91 = vmatpush1.msra.mxu0 %v67
    %92 = vmatprep.subr.mxu0 0.0
    %93 = vmatpush1.msra.mxu0 %v68
    %94 = vmatprep.subr.mxu0 0.0
    %95 = vmatpush1.msra.mxu0 0.0
    %96 = vmatprep.subr.mxu0 0.0
    %97 = vmatpush1.msra.mxu0 0.0
    %98 = vmatprep.subr.mxu0 0.0
    %99 = vmatpush1.msra.mxu0 0.0
    %100 = vmatprep.subr.mxu0 0.0
    %101 = vmatpush1.msra.mxu0 0.0
    %102 = vmatprep.subr.mxu0 0.0
    %103 = vmatpush1.msra.mxu0 0.0
    %104 = vmatprep.subr.mxu0 0.0
    %105 = vmatpush1.msra.mxu0 0.0
    %106 = vmatprep.subr.mxu0 0.0
    %107 = vmatpush1.msra.mxu0 0.0
    %108 = vmatprep.subr.mxu0 0.0
    %109 = vmatpush1.msra.mxu0 0.0
    %110 = vmatprep.subr.mxu0 0.0
    %111 = vmatpush1.msra.mxu0 0.0
    %112 = vmatprep.subr.mxu0 0.0
    %113 = vmatpush1.msra.mxu0 0.0
    %114 = vmatprep.subr.mxu0 0.0
    %115 = vmatpush1.msra.mxu0 0.0
    %116 = vmatprep.subr.mxu0 0.0
    %117 = vmatpush1.msra.mxu0 0.0
    %118 = vmatprep.subr.mxu0 0.0
    %119 = vmatpush1.msra.mxu0 0.0
    %120 = vmatprep.subr.mxu0 0.0
    %121 = vmatpush1.msra.mxu0 0.0
    %122 = vmatprep.subr.mxu0 0.0
    %123 = vmatpush1.msra.mxu0 0.0
    %124 = vmatprep.subr.mxu0 0.0
    %125 = vmatpush1.msra.mxu0 0.0
    %126 = vmatprep.subr.mxu0 0.0
    %127 = vmatpush1.msra.mxu0 0.0
    %128 = vmatprep.subr.mxu0 0.0
    %129 = vmatpush1.msra.mxu0 0.0
    %130 = vmatprep.subr.mxu0 0.0
    %131 = vmatpush1.msra.mxu0 0.0
    %132 = vmatprep.subr.mxu0 0.0
    %133 = vmatpush1.msra.mxu0 0.0
    %134 = vmatprep.subr.mxu0 0.0
    %135 = vmatpush1.msra.mxu0 0.0
    %136 = vmatprep.subr.mxu0 0.0
    %137 = vmatpush1.msra.mxu0 0.0
    %138 = vmatprep.subr.mxu0 0.0
    %139 = vmatpush1.msra.mxu0 0.0
    %140 = vmatprep.subr.mxu0 0.0
    %141 = vmatpush1.msra.mxu0 0.0
    %142 = vmatprep.subr.mxu0 0.0
    %143 = vmatpush1.msra.mxu0 0.0
    %144 = vmatprep.subr.mxu0 0.0
    %145 = vmatpush1.msra.mxu0 0.0
    %146 = vmatprep.subr.mxu0 0.0
    %147 = vmatpush1.msra.mxu0 0.0
    %148 = vmatprep.subr.mxu0 0.0
    %149 = vmatpush1.msra.mxu0 0.0
    %150 = vmatprep.mubr.f32.mxu0 0.0
    %151 = vmatmul.mubr.f32.gmra.mrb[0].mxu0 %v84
    %v152 = vpop.f32.mrb[0].mxu0
    %v153 = vadd.f32 %v80, %v152
    %v154 = vpop.f32.mrb[0].mxu0
    %155 = vdwg.mxu0
    %vm156 = vcmask 779264
    %157 = vst.msk [vmem:[#allocation2] sm:$0x3] %vm156, %v153
    %s158 = scalar_lea.vmem [#allocation3], 2
    %v159 = vld [vmem:[%s158] sm:$0x3]
    %v161 = vsel %vm82, %v159, 0
    %163 = vmatprep.subr.mxu0 0.0
    %164 = vmatpush1.msra.mxu0 %v65
    %165 = vmatprep.subr.mxu0 0.0
    %166 = vmatpush1.msra.mxu0 %v66
    %167 = vmatprep.subr.mxu0 0.0
    %168 = vmatpush1.msra.mxu0 %v67
    %169 = vmatprep.subr.mxu0 0.0
    %170 = vmatpush1.msra.mxu0 %v68
    %171 = vmatprep.subr.mxu0 0.0
    %172 = vmatpush1.msra.mxu0 0.0
    %173 = vmatprep.subr.mxu0 0.0
    %174 = vmatpush1.msra.mxu0 0.0
    %175 = vmatprep.subr.mxu0 0.0
    %176 = vmatpush1.msra.mxu0 0.0
    %177 = vmatprep.subr.mxu0 0.0
    %178 = vmatpush1.msra.mxu0 0.0
    %179 = vmatprep.subr.mxu0 0.0
    %180 = vmatpush1.msra.mxu0 0.0
    %181 = vmatprep.subr.mxu0 0.0
    %182 = vmatpush1.msra.mxu0 0.0
    %183 = vmatprep.subr.mxu0 0.0
    %184 = vmatpush1.msra.mxu0 0.0
    %185 = vmatprep.subr.mxu0 0.0
    %186 = vmatpush1.msra.mxu0 0.0
    %187 = vmatprep.subr.mxu0 0.0
    %188 = vmatpush1.msra.mxu0 0.0
    %189 = vmatprep.subr.mxu0 0.0
    %190 = vmatpush1.msra.mxu0 0.0
    %191 = vmatprep.subr.mxu0 0.0
    %192 = vmatpush1.msra.mxu0 0.0
    %193 = vmatprep.subr.mxu0 0.0
    %194 = vmatpush1.msra.mxu0 0.0
    %195 = vmatprep.subr.mxu0 0.0
    %196 = vmatpush1.msra.mxu0 0.0
    %197 = vmatprep.subr.mxu0 0.0
    %198 = vmatpush1.msra.mxu0 0.0
    %199 = vmatprep.subr.mxu0 0.0
    %200 = vmatpush1.msra.mxu0 0.0
    %201 = vmatprep.subr.mxu0 0.0
    %202 = vmatpush1.msra.mxu0 0.0
    %203 = vmatprep.subr.mxu0 0.0
    %204 = vmatpush1.msra.mxu0 0.0
    %205 = vmatprep.subr.mxu0 0.0
    %206 = vmatpush1.msra.mxu0 0.0
    %207 = vmatprep.subr.mxu0 0.0
    %208 = vmatpush1.msra.mxu0 0.0
    %209 = vmatprep.subr.mxu0 0.0
    %210 = vmatpush1.msra.mxu0 0.0
    %211 = vmatprep.subr.mxu0 0.0
    %212 = vmatpush1.msra.mxu0 0.0
    %213 = vmatprep.subr.mxu0 0.0
    %214 = vmatpush1.msra.mxu0 0.0
    %215 = vmatprep.subr.mxu0 0.0
    %216 = vmatpush1.msra.mxu0 0.0
    %217 = vmatprep.subr.mxu0 0.0
    %218 = vmatpush1.msra.mxu0 0.0
    %219 = vmatprep.subr.mxu0 0.0
    %220 = vmatpush1.msra.mxu0 0.0
    %221 = vmatprep.subr.mxu0 0.0
    %222 = vmatpush1.msra.mxu0 0.0
    %223 = vmatprep.subr.mxu0 0.0
    %224 = vmatpush1.msra.mxu0 0.0
    %225 = vmatprep.subr.mxu0 0.0
    %226 = vmatpush1.msra.mxu0 0.0
    %227 = vmatprep.mubr.f32.mxu0 0.0
    %228 = vmatmul.mubr.f32.gmra.mrb[0].mxu0 %v161
    %v229 = vpop.f32.mrb[0].mxu0
    %v230 = vadd.f32 %v80, %v229
    %v231 = vpop.f32.mrb[0].mxu0
    %232 = vdwg.mxu0
    %s233 = scalar_lea.vmem [#allocation2], 2
    %234 = vst.msk [vmem:[%s233] sm:$0x3] %vm156, %v230
    %s235 = scalar_lea.vmem [#allocation3], 4
    %v236 = vld [vmem:[%s235] sm:$0x3]
    %v238 = vsel %vm82, %v236, 0
    %240 = vmatprep.subr.mxu0 0.0
    %241 = vmatpush1.msra.mxu0 %v65
    %242 = vmatprep.subr.mxu0 0.0
    %243 = vmatpush1.msra.mxu0 %v66
    %244 = vmatprep.subr.mxu0 0.0
    %245 = vmatpush1.msra.mxu0 %v67
    %246 = vmatprep.subr.mxu0 0.0
    %247 = vmatpush1.msra.mxu0 %v68
    %248 = vmatprep.subr.mxu0 0.0
    %249 = vmatpush1.msra.mxu0 0.0
    %250 = vmatprep.subr.mxu0 0.0
    %251 = vmatpush1.msra.mxu0 0.0
    %252 = vmatprep.subr.mxu0 0.0
    %253 = vmatpush1.msra.mxu0 0.0
    %254 = vmatprep.subr.mxu0 0.0
    %255 = vmatpush1.msra.mxu0 0.0
    %256 = vmatprep.subr.mxu0 0.0
    %257 = vmatpush1.msra.mxu0 0.0
    %258 = vmatprep.subr.mxu0 0.0
    %259 = vmatpush1.msra.mxu0 0.0
    %260 = vmatprep.subr.mxu0 0.0
    %261 = vmatpush1.msra.mxu0 0.0
    %262 = vmatprep.subr.mxu0 0.0
    %263 = vmatpush1.msra.mxu0 0.0
    %264 = vmatprep.subr.mxu0 0.0
    %265 = vmatpush1.msra.mxu0 0.0
    %266 = vmatprep.subr.mxu0 0.0
    %267 = vmatpush1.msra.mxu0 0.0
    %268 = vmatprep.subr.mxu0 0.0
    %269 = vmatpush1.msra.mxu0 0.0
    %270 = vmatprep.subr.mxu0 0.0
    %271 = vmatpush1.msra.mxu0 0.0
    %272 = vmatprep.subr.mxu0 0.0
    %273 = vmatpush1.msra.mxu0 0.0
    %274 = vmatprep.subr.mxu0 0.0
    %275 = vmatpush1.msra.mxu0 0.0
    %276 = vmatprep.subr.mxu0 0.0
    %277 = vmatpush1.msra.mxu0 0.0
    %278 = vmatprep.subr.mxu0 0.0
    %279 = vmatpush1.msra.mxu0 0.0
    %280 = vmatprep.subr.mxu0 0.0
    %281 = vmatpush1.msra.mxu0 0.0
    %282 = vmatprep.subr.mxu0 0.0
    %283 = vmatpush1.msra.mxu0 0.0
    %284 = vmatprep.subr.mxu0 0.0
    %285 = vmatpush1.msra.mxu0 0.0
    %286 = vmatprep.subr.mxu0 0.0
    %287 = vmatpush1.msra.mxu0 0.0
    %288 = vmatprep.subr.mxu0 0.0
    %289 = vmatpush1.msra.mxu0 0.0
    %290 = vmatprep.subr.mxu0 0.0
    %291 = vmatpush1.msra.mxu0 0.0
    %292 = vmatprep.subr.mxu0 0.0
    %293 = vmatpush1.msra.mxu0 0.0
    %294 = vmatprep.subr.mxu0 0.0
    %295 = vmatpush1.msra.mxu0 0.0
    %296 = vmatprep.subr.mxu0 0.0
    %297 = vmatpush1.msra.mxu0 0.0
    %298 = vmatprep.subr.mxu0 0.0
    %299 = vmatpush1.msra.mxu0 0.0
    %300 = vmatprep.subr.mxu0 0.0
    %301 = vmatpush1.msra.mxu0 0.0
    %302 = vmatprep.subr.mxu0 0.0
    %303 = vmatpush1.msra.mxu0 0.0
    %304 = vmatprep.mubr.f32.mxu0 0.0
    %305 = vmatmul.mubr.f32.gmra.mrb[0].mxu0 %v238
    %v306 = vpop.f32.mrb[0].mxu0
    %v307 = vadd.f32 %v80, %v306
    %v308 = vpop.f32.mrb[0].mxu0
    %309 = vdwg.mxu0
    %s310 = scalar_lea.vmem [#allocation2], 4
    %311 = vst.msk [vmem:[%s310] sm:$0x3] %vm156, %v307
    %s312 = scalar_lea.vmem [#allocation3], 6
    %v313 = vld [vmem:[%s312] sm:$0x3]
    %v315 = vsel %vm82, %v313, 0
    %317 = vmatprep.subr.mxu0 0.0
    %318 = vmatpush1.msra.mxu0 %v65
    %319 = vmatprep.subr.mxu0 0.0
    %320 = vmatpush1.msra.mxu0 %v66
    %321 = vmatprep.subr.mxu0 0.0
    %322 = vmatpush1.msra.mxu0 %v67
    %323 = vmatprep.subr.mxu0 0.0
    %324 = vmatpush1.msra.mxu0 %v68
    %325 = vmatprep.subr.mxu0 0.0
    %326 = vmatpush1.msra.mxu0 0.0
    %327 = vmatprep.subr.mxu0 0.0
    %328 = vmatpush1.msra.mxu0 0.0
    %329 = vmatprep.subr.mxu0 0.0
    %330 = vmatpush1.msra.mxu0 0.0
    %331 = vmatprep.subr.mxu0 0.0
    %332 = vmatpush1.msra.mxu0 0.0
    %333 = vmatprep.subr.mxu0 0.0
    %334 = vmatpush1.msra.mxu0 0.0
    %335 = vmatprep.subr.mxu0 0.0
    %336 = vmatpush1.msra.mxu0 0.0
    %337 = vmatprep.subr.mxu0 0.0
    %338 = vmatpush1.msra.mxu0 0.0
    %339 = vmatprep.subr.mxu0 0.0
    %340 = vmatpush1.msra.mxu0 0.0
    %341 = vmatprep.subr.mxu0 0.0
    %342 = vmatpush1.msra.mxu0 0.0
    %343 = vmatprep.subr.mxu0 0.0
    %344 = vmatpush1.msra.mxu0 0.0
    %345 = vmatprep.subr.mxu0 0.0
    %346 = vmatpush1.msra.mxu0 0.0
    %347 = vmatprep.subr.mxu0 0.0
    %348 = vmatpush1.msra.mxu0 0.0
    %349 = vmatprep.subr.mxu0 0.0
    %350 = vmatpush1.msra.mxu0 0.0
    %351 = vmatprep.subr.mxu0 0.0
    %352 = vmatpush1.msra.mxu0 0.0
    %353 = vmatprep.subr.mxu0 0.0
    %354 = vmatpush1.msra.mxu0 0.0
    %355 = vmatprep.subr.mxu0 0.0
    %356 = vmatpush1.msra.mxu0 0.0
    %357 = vmatprep.subr.mxu0 0.0
    %358 = vmatpush1.msra.mxu0 0.0
    %359 = vmatprep.subr.mxu0 0.0
    %360 = vmatpush1.msra.mxu0 0.0
    %361 = vmatprep.subr.mxu0 0.0
    %362 = vmatpush1.msra.mxu0 0.0
    %363 = vmatprep.subr.mxu0 0.0
    %364 = vmatpush1.msra.mxu0 0.0
    %365 = vmatprep.subr.mxu0 0.0
    %366 = vmatpush1.msra.mxu0 0.0
    %367 = vmatprep.subr.mxu0 0.0
    %368 = vmatpush1.msra.mxu0 0.0
    %369 = vmatprep.subr.mxu0 0.0
    %370 = vmatpush1.msra.mxu0 0.0
    %371 = vmatprep.subr.mxu0 0.0
    %372 = vmatpush1.msra.mxu0 0.0
    %373 = vmatprep.subr.mxu0 0.0
    %374 = vmatpush1.msra.mxu0 0.0
    %375 = vmatprep.subr.mxu0 0.0
    %376 = vmatpush1.msra.mxu0 0.0
    %377 = vmatprep.subr.mxu0 0.0
    %378 = vmatpush1.msra.mxu0 0.0
    %379 = vmatprep.subr.mxu0 0.0
    %380 = vmatpush1.msra.mxu0 0.0
    %381 = vmatprep.mubr.f32.mxu0 0.0
    %382 = vmatmul.mubr.f32.gmra.mrb[0].mxu0 %v315
    %v383 = vpop.f32.mrb[0].mxu0
    %v384 = vadd.f32 %v80, %v383
    %v385 = vpop.f32.mrb[0].mxu0
    %386 = vdwg.mxu0
    %s387 = scalar_lea.vmem [#allocation2], 6
    %388 = vst.msk [vmem:[%s387] sm:$0x3] %vm156, %v384
    %s389 = scalar_lea.vmem [#allocation3], 8
    %v390 = vld [vmem:[%s389] sm:$0x3]
    %v392 = vsel %vm82, %v390, 0
    %394 = vmatprep.subr.mxu0 0.0
    %395 = vmatpush1.msra.mxu0 %v65
    %396 = vmatprep.subr.mxu0 0.0
    %397 = vmatpush1.msra.mxu0 %v66
    %398 = vmatprep.subr.mxu0 0.0
    %399 = vmatpush1.msra.mxu0 %v67
    %400 = vmatprep.subr.mxu0 0.0
    %401 = vmatpush1.msra.mxu0 %v68
    %402 = vmatprep.subr.mxu0 0.0
    %403 = vmatpush1.msra.mxu0 0.0
    %404 = vmatprep.subr.mxu0 0.0
    %405 = vmatpush1.msra.mxu0 0.0
    %406 = vmatprep.subr.mxu0 0.0
    %407 = vmatpush1.msra.mxu0 0.0
    %408 = vmatprep.subr.mxu0 0.0
    %409 = vmatpush1.msra.mxu0 0.0
    %410 = vmatprep.subr.mxu0 0.0
    %411 = vmatpush1.msra.mxu0 0.0
    %412 = vmatprep.subr.mxu0 0.0
    %413 = vmatpush1.msra.mxu0 0.0
    %414 = vmatprep.subr.mxu0 0.0
    %415 = vmatpush1.msra.mxu0 0.0
    %416 = vmatprep.subr.mxu0 0.0
    %417 = vmatpush1.msra.mxu0 0.0
    %418 = vmatprep.subr.mxu0 0.0
    %419 = vmatpush1.msra.mxu0 0.0
    %420 = vmatprep.subr.mxu0 0.0
    %421 = vmatpush1.msra.mxu0 0.0
    %422 = vmatprep.subr.mxu0 0.0
    %423 = vmatpush1.msra.mxu0 0.0
    %424 = vmatprep.subr.mxu0 0.0
    %425 = vmatpush1.msra.mxu0 0.0
    %426 = vmatprep.subr.mxu0 0.0
    %427 = vmatpush1.msra.mxu0 0.0
    %428 = vmatprep.subr.mxu0 0.0
    %429 = vmatpush1.msra.mxu0 0.0
    %430 = vmatprep.subr.mxu0 0.0
    %431 = vmatpush1.msra.mxu0 0.0
    %432 = vmatprep.subr.mxu0 0.0
    %433 = vmatpush1.msra.mxu0 0.0
    %434 = vmatprep.subr.mxu0 0.0
    %435 = vmatpush1.msra.mxu0 0.0
    %436 = vmatprep.subr.mxu0 0.0
    %437 = vmatpush1.msra.mxu0 0.0
    %438 = vmatprep.subr.mxu0 0.0
    %439 = vmatpush1.msra.mxu0 0.0
    %440 = vmatprep.subr.mxu0 0.0
    %441 = vmatpush1.msra.mxu0 0.0
    %442 = vmatprep.subr.mxu0 0.0
    %443 = vmatpush1.msra.mxu0 0.0
    %444 = vmatprep.subr.mxu0 0.0
    %445 = vmatpush1.msra.mxu0 0.0
    %446 = vmatprep.subr.mxu0 0.0
    %447 = vmatpush1.msra.mxu0 0.0
    %448 = vmatprep.subr.mxu0 0.0
    %449 = vmatpush1.msra.mxu0 0.0
    %450 = vmatprep.subr.mxu0 0.0
    %451 = vmatpush1.msra.mxu0 0.0
    %452 = vmatprep.subr.mxu0 0.0
    %453 = vmatpush1.msra.mxu0 0.0
    %454 = vmatprep.subr.mxu0 0.0
    %455 = vmatpush1.msra.mxu0 0.0
    %456 = vmatprep.subr.mxu0 0.0
    %457 = vmatpush1.msra.mxu0 0.0
    %458 = vmatprep.mubr.f32.mxu0 0.0
    %459 = vmatmul.mubr.f32.gmra.mrb[0].mxu0 %v392
    %v460 = vpop.f32.mrb[0].mxu0
    %v461 = vadd.f32 %v80, %v460
    %v462 = vpop.f32.mrb[0].mxu0
    %463 = vdwg.mxu0
    %s464 = scalar_lea.vmem [#allocation2], 8
    %465 = vst.msk [vmem:[%s464] sm:$0x3] %vm156, %v461
    %s466 = scalar_lea.vmem [#allocation3], 10
    %v467 = vld [vmem:[%s466] sm:$0x3]
    %v469 = vsel %vm82, %v467, 0
    %471 = vmatprep.subr.mxu0 0.0
    %472 = vmatpush1.msra.mxu0 %v65
    %473 = vmatprep.subr.mxu0 0.0
    %474 = vmatpush1.msra.mxu0 %v66
    %475 = vmatprep.subr.mxu0 0.0
    %476 = vmatpush1.msra.mxu0 %v67
    %477 = vmatprep.subr.mxu0 0.0
    %478 = vmatpush1.msra.mxu0 %v68
    %479 = vmatprep.subr.mxu0 0.0
    %480 = vmatpush1.msra.mxu0 0.0
    %481 = vmatprep.subr.mxu0 0.0
    %482 = vmatpush1.msra.mxu0 0.0
    %483 = vmatprep.subr.mxu0 0.0
    %484 = vmatpush1.msra.mxu0 0.0
    %485 = vmatprep.subr.mxu0 0.0
    %486 = vmatpush1.msra.mxu0 0.0
    %487 = vmatprep.subr.mxu0 0.0
    %488 = vmatpush1.msra.mxu0 0.0
    %489 = vmatprep.subr.mxu0 0.0
    %490 = vmatpush1.msra.mxu0 0.0
    %491 = vmatprep.subr.mxu0 0.0
    %492 = vmatpush1.msra.mxu0 0.0
    %493 = vmatprep.subr.mxu0 0.0
    %494 = vmatpush1.msra.mxu0 0.0
    %495 = vmatprep.subr.mxu0 0.0
    %496 = vmatpush1.msra.mxu0 0.0
    %497 = vmatprep.subr.mxu0 0.0
    %498 = vmatpush1.msra.mxu0 0.0
    %499 = vmatprep.subr.mxu0 0.0
    %500 = vmatpush1.msra.mxu0 0.0
    %501 = vmatprep.subr.mxu0 0.0
    %502 = vmatpush1.msra.mxu0 0.0
    %503 = vmatprep.subr.mxu0 0.0
    %504 = vmatpush1.msra.mxu0 0.0
    %505 = vmatprep.subr.mxu0 0.0
    %506 = vmatpush1.msra.mxu0 0.0
    %507 = vmatprep.subr.mxu0 0.0
    %508 = vmatpush1.msra.mxu0 0.0
    %509 = vmatprep.subr.mxu0 0.0
    %510 = vmatpush1.msra.mxu0 0.0
    %511 = vmatprep.subr.mxu0 0.0
    %512 = vmatpush1.msra.mxu0 0.0
    %513 = vmatprep.subr.mxu0 0.0
    %514 = vmatpush1.msra.mxu0 0.0
    %515 = vmatprep.subr.mxu0 0.0
    %516 = vmatpush1.msra.mxu0 0.0
    %517 = vmatprep.subr.mxu0 0.0
    %518 = vmatpush1.msra.mxu0 0.0
    %519 = vmatprep.subr.mxu0 0.0
    %520 = vmatpush1.msra.mxu0 0.0
    %521 = vmatprep.subr.mxu0 0.0
    %522 = vmatpush1.msra.mxu0 0.0
    %523 = vmatprep.subr.mxu0 0.0
    %524 = vmatpush1.msra.mxu0 0.0
    %525 = vmatprep.subr.mxu0 0.0
    %526 = vmatpush1.msra.mxu0 0.0
    %527 = vmatprep.subr.mxu0 0.0
    %528 = vmatpush1.msra.mxu0 0.0
    %529 = vmatprep.subr.mxu0 0.0
    %530 = vmatpush1.msra.mxu0 0.0
    %531 = vmatprep.subr.mxu0 0.0
    %532 = vmatpush1.msra.mxu0 0.0
    %533 = vmatprep.subr.mxu0 0.0
    %534 = vmatpush1.msra.mxu0 0.0
    %535 = vmatprep.mubr.f32.mxu0 0.0
    %536 = vmatmul.mubr.f32.gmra.mrb[0].mxu0 %v469
    %v537 = vpop.f32.mrb[0].mxu0
    %v538 = vadd.f32 %v80, %v537
    %v539 = vpop.f32.mrb[0].mxu0
    %540 = vdwg.mxu0
    %s541 = scalar_lea.vmem [#allocation2], 10
    %542 = vst.msk [vmem:[%s541] sm:$0x3] %vm156, %v538
    %s543 = scalar_lea.vmem [#allocation3], 12
    %v544 = vld [vmem:[%s543] sm:$0x3]
    %v546 = vsel %vm82, %v544, 0
    %548 = vmatprep.subr.mxu0 0.0
    %549 = vmatpush1.msra.mxu0 %v65
    %550 = vmatprep.subr.mxu0 0.0
    %551 = vmatpush1.msra.mxu0 %v66
    %552 = vmatprep.subr.mxu0 0.0
    %553 = vmatpush1.msra.mxu0 %v67
    %554 = vmatprep.subr.mxu0 0.0
    %555 = vmatpush1.msra.mxu0 %v68
    %556 = vmatprep.subr.mxu0 0.0
    %557 = vmatpush1.msra.mxu0 0.0
    %558 = vmatprep.subr.mxu0 0.0
    %559 = vmatpush1.msra.mxu0 0.0
    %560 = vmatprep.subr.mxu0 0.0
    %561 = vmatpush1.msra.mxu0 0.0
    %562 = vmatprep.subr.mxu0 0.0
    %563 = vmatpush1.msra.mxu0 0.0
    %564 = vmatprep.subr.mxu0 0.0
    %565 = vmatpush1.msra.mxu0 0.0
    %566 = vmatprep.subr.mxu0 0.0
    %567 = vmatpush1.msra.mxu0 0.0
    %568 = vmatprep.subr.mxu0 0.0
    %569 = vmatpush1.msra.mxu0 0.0
    %570 = vmatprep.subr.mxu0 0.0
    %571 = vmatpush1.msra.mxu0 0.0
    %572 = vmatprep.subr.mxu0 0.0
    %573 = vmatpush1.msra.mxu0 0.0
    %574 = vmatprep.subr.mxu0 0.0
    %575 = vmatpush1.msra.mxu0 0.0
    %576 = vmatprep.subr.mxu0 0.0
    %577 = vmatpush1.msra.mxu0 0.0
    %578 = vmatprep.subr.mxu0 0.0
    %579 = vmatpush1.msra.mxu0 0.0
    %580 = vmatprep.subr.mxu0 0.0
    %581 = vmatpush1.msra.mxu0 0.0
    %582 = vmatprep.subr.mxu0 0.0
    %583 = vmatpush1.msra.mxu0 0.0
    %584 = vmatprep.subr.mxu0 0.0
    %585 = vmatpush1.msra.mxu0 0.0
    %586 = vmatprep.subr.mxu0 0.0
    %587 = vmatpush1.msra.mxu0 0.0
    %588 = vmatprep.subr.mxu0 0.0
    %589 = vmatpush1.msra.mxu0 0.0
    %590 = vmatprep.subr.mxu0 0.0
    %591 = vmatpush1.msra.mxu0 0.0
    %592 = vmatprep.subr.mxu0 0.0
    %593 = vmatpush1.msra.mxu0 0.0
    %594 = vmatprep.subr.mxu0 0.0
    %595 = vmatpush1.msra.mxu0 0.0
    %596 = vmatprep.subr.mxu0 0.0
    %597 = vmatpush1.msra.mxu0 0.0
    %598 = vmatprep.subr.mxu0 0.0
    %599 = vmatpush1.msra.mxu0 0.0
    %600 = vmatprep.subr.mxu0 0.0
    %601 = vmatpush1.msra.mxu0 0.0
    %602 = vmatprep.subr.mxu0 0.0
    %603 = vmatpush1.msra.mxu0 0.0
    %604 = vmatprep.subr.mxu0 0.0
    %605 = vmatpush1.msra.mxu0 0.0
    %606 = vmatprep.subr.mxu0 0.0
    %607 = vmatpush1.msra.mxu0 0.0
    %608 = vmatprep.subr.mxu0 0.0
    %609 = vmatpush1.msra.mxu0 0.0
    %610 = vmatprep.subr.mxu0 0.0
    %611 = vmatpush1.msra.mxu0 0.0
    %612 = vmatprep.mubr.f32.mxu0 0.0
    %613 = vmatmul.mubr.f32.gmra.mrb[0].mxu0 %v546
    %v614 = vpop.f32.mrb[0].mxu0
    %v615 = vadd.f32 %v80, %v614
    %v616 = vpop.f32.mrb[0].mxu0
    %617 = vdwg.mxu0
    %s618 = scalar_lea.vmem [#allocation2], 12
    %619 = vst.msk [vmem:[%s618] sm:$0x3] %vm156, %v615
    %s620 = scalar_lea.vmem [#allocation3], 14
    %v621 = vld [vmem:[%s620] sm:$0x3]
    %v623 = vsel %vm82, %v621, 0
    %625 = vmatprep.subr.mxu0 0.0
    %626 = vmatpush1.msra.mxu0 %v65
    %627 = vmatprep.subr.mxu0 0.0
    %628 = vmatpush1.msra.mxu0 %v66
    %629 = vmatprep.subr.mxu0 0.0
    %630 = vmatpush1.msra.mxu0 %v67
    %631 = vmatprep.subr.mxu0 0.0
    %632 = vmatpush1.msra.mxu0 %v68
    %633 = vmatprep.subr.mxu0 0.0
    %634 = vmatpush1.msra.mxu0 0.0
    %635 = vmatprep.subr.mxu0 0.0
    %636 = vmatpush1.msra.mxu0 0.0
    %637 = vmatprep.subr.mxu0 0.0
    %638 = vmatpush1.msra.mxu0 0.0
    %639 = vmatprep.subr.mxu0 0.0
    %640 = vmatpush1.msra.mxu0 0.0
    %641 = vmatprep.subr.mxu0 0.0
    %642 = vmatpush1.msra.mxu0 0.0
    %643 = vmatprep.subr.mxu0 0.0
    %644 = vmatpush1.msra.mxu0 0.0
    %645 = vmatprep.subr.mxu0 0.0
    %646 = vmatpush1.msra.mxu0 0.0
    %647 = vmatprep.subr.mxu0 0.0
    %648 = vmatpush1.msra.mxu0 0.0
    %649 = vmatprep.subr.mxu0 0.0
    %650 = vmatpush1.msra.mxu0 0.0
    %651 = vmatprep.subr.mxu0 0.0
    %652 = vmatpush1.msra.mxu0 0.0
    %653 = vmatprep.subr.mxu0 0.0
    %654 = vmatpush1.msra.mxu0 0.0
    %655 = vmatprep.subr.mxu0 0.0
    %656 = vmatpush1.msra.mxu0 0.0
    %657 = vmatprep.subr.mxu0 0.0
    %658 = vmatpush1.msra.mxu0 0.0
    %659 = vmatprep.subr.mxu0 0.0
    %660 = vmatpush1.msra.mxu0 0.0
    %661 = vmatprep.subr.mxu0 0.0
    %662 = vmatpush1.msra.mxu0 0.0
    %663 = vmatprep.subr.mxu0 0.0
    %664 = vmatpush1.msra.mxu0 0.0
    %665 = vmatprep.subr.mxu0 0.0
    %666 = vmatpush1.msra.mxu0 0.0
    %667 = vmatprep.subr.mxu0 0.0
    %668 = vmatpush1.msra.mxu0 0.0
    %669 = vmatprep.subr.mxu0 0.0
    %670 = vmatpush1.msra.mxu0 0.0
    %671 = vmatprep.subr.mxu0 0.0
    %672 = vmatpush1.msra.mxu0 0.0
    %673 = vmatprep.subr.mxu0 0.0
    %674 = vmatpush1.msra.mxu0 0.0
    %675 = vmatprep.subr.mxu0 0.0
    %676 = vmatpush1.msra.mxu0 0.0
    %677 = vmatprep.subr.mxu0 0.0
    %678 = vmatpush1.msra.mxu0 0.0
    %679 = vmatprep.subr.mxu0 0.0
    %680 = vmatpush1.msra.mxu0 0.0
    %681 = vmatprep.subr.mxu0 0.0
    %682 = vmatpush1.msra.mxu0 0.0
    %683 = vmatprep.subr.mxu0 0.0
    %684 = vmatpush1.msra.mxu0 0.0
    %685 = vmatprep.subr.mxu0 0.0
    %686 = vmatpush1.msra.mxu0 0.0
    %687 = vmatprep.subr.mxu0 0.0
    %688 = vmatpush1.msra.mxu0 0.0
    %689 = vmatprep.mubr.f32.mxu0 0.0
    %690 = vmatmul.mubr.f32.gmra.mrb[0].mxu0 %v623
    %v691 = vpop.f32.mrb[0].mxu0
    %v692 = vadd.f32 %v80, %v691
    %v693 = vpop.f32.mrb[0].mxu0
    %694 = vdwg.mxu0
    %s695 = scalar_lea.vmem [#allocation2], 14
    %696 = vst.msk [vmem:[%s695] sm:$0x3] %vm156, %v692
    loop: start=0, step=1, limit=8
    $region34: #{tpu_custom_call.1} parent=1 // loop_pre_header
      _
    $region35: #{tpu_custom_call.1} parent=1 // loop_header
      %s698 = sphi 0, %s702
      %p699 = scmp.ge.s32.totalorder %s698, 8
      %v703 = vphi 0.0, %v813
    $region36: #{tpu_custom_call.1} parent=1 // loop_header_branch
      %701 = sbr.rel (%p699) target = $region40
    $region37: #{tpu_custom_call.1} parent=1 // loop_body
      %s704 = smul.u32 %s698, 2
      %s705 = scalar_lea.vmem [#allocation2], %s704
      %v706 = vld [vmem:[%s705] sm:$0x3]
      %v708 = vlaneseq
      %v709 = vshrl.u32 %v708, 7
      %v710 = vsub.s32 0, %v709
      %v711 = vrot.slane %v74, %v710
      %714 = vrot.lane.b32.xlu0 %v703, 96
      %v715 = vpop.permute.xlu0 %714
      %v716 = vsel %vm82, %v715, 0
      %718 = vmatprep.subr.mxu0 0.0
      %719 = vmatpush1.msra.mxu0 %v69
      %720 = vmatprep.subr.mxu0 0.0
      %721 = vmatpush1.msra.mxu0 %v70
      %722 = vmatprep.subr.mxu0 0.0
      %723 = vmatpush1.msra.mxu0 %v71
      %724 = vmatprep.subr.mxu0 0.0
      %725 = vmatpush1.msra.mxu0 %v72
      %726 = vmatprep.subr.mxu0 0.0
      %727 = vmatpush1.msra.mxu0 0.0
      %728 = vmatprep.subr.mxu0 0.0
      %729 = vmatpush1.msra.mxu0 0.0
      %730 = vmatprep.subr.mxu0 0.0
      %731 = vmatpush1.msra.mxu0 0.0
      %732 = vmatprep.subr.mxu0 0.0
      %733 = vmatpush1.msra.mxu0 0.0
      %734 = vmatprep.subr.mxu0 0.0
      %735 = vmatpush1.msra.mxu0 0.0
      %736 = vmatprep.subr.mxu0 0.0
      %737 = vmatpush1.msra.mxu0 0.0
      %738 = vmatprep.subr.mxu0 0.0
      %739 = vmatpush1.msra.mxu0 0.0
      %740 = vmatprep.subr.mxu0 0.0
      %741 = vmatpush1.msra.mxu0 0.0
      %742 = vmatprep.subr.mxu0 0.0
      %743 = vmatpush1.msra.mxu0 0.0
      %744 = vmatprep.subr.mxu0 0.0
      %745 = vmatpush1.msra.mxu0 0.0
      %746 = vmatprep.subr.mxu0 0.0
      %747 = vmatpush1.msra.mxu0 0.0
      %748 = vmatprep.subr.mxu0 0.0
      %749 = vmatpush1.msra.mxu0 0.0
      %750 = vmatprep.subr.mxu0 0.0
      %751 = vmatpush1.msra.mxu0 0.0
      %752 = vmatprep.subr.mxu0 0.0
      %753 = vmatpush1.msra.mxu0 0.0
      %754 = vmatprep.subr.mxu0 0.0
      %755 = vmatpush1.msra.mxu0 0.0
      %756 = vmatprep.subr.mxu0 0.0
      %757 = vmatpush1.msra.mxu0 0.0
      %758 = vmatprep.subr.mxu0 0.0
      %759 = vmatpush1.msra.mxu0 0.0
      %760 = vmatprep.subr.mxu0 0.0
      %761 = vmatpush1.msra.mxu0 0.0
      %762 = vmatprep.subr.mxu0 0.0
      %763 = vmatpush1.msra.mxu0 0.0
      %764 = vmatprep.subr.mxu0 0.0
      %765 = vmatpush1.msra.mxu0 0.0
      %766 = vmatprep.subr.mxu0 0.0
      %767 = vmatpush1.msra.mxu0 0.0
      %768 = vmatprep.subr.mxu0 0.0
      %769 = vmatpush1.msra.mxu0 0.0
      %770 = vmatprep.subr.mxu0 0.0
      %771 = vmatpush1.msra.mxu0 0.0
      %772 = vmatprep.subr.mxu0 0.0
      %773 = vmatpush1.msra.mxu0 0.0
      %774 = vmatprep.subr.mxu0 0.0
      %775 = vmatpush1.msra.mxu0 0.0
      %776 = vmatprep.subr.mxu0 0.0
      %777 = vmatpush1.msra.mxu0 0.0
      %778 = vmatprep.subr.mxu0 0.0
      %779 = vmatpush1.msra.mxu0 0.0
      %780 = vmatprep.subr.mxu0 0.0
      %781 = vmatpush1.msra.mxu0 0.0
      %782 = vmatprep.mubr.f32.mxu0 0.0
      %783 = vmatmul.mubr.f32.gmra.mrb[0].mxu0 %v716
      %v784 = vpop.f32.mrb[0].mxu0
      %v785 = vadd.f32 %v711, %v784
      %v786 = vpop.f32.mrb[0].mxu0
      %787 = vdwg.mxu0
      %v788 = vadd.f32 %v706, %v785
      %v789 = vxor.u32 %v788, 2147483648
      %v790 = vmul.f32 %v789, 1.442695
      %v791 = vpow.pop %v790
      %v792 = vadd.f32 %v791, 1.0
      %v793 = vrcp.pop %v792
      %v794 = vmul.f32 1.0, %v793
      %796 = vrot.lane.b32.xlu0 %v785, 64
      %v797 = vpop.permute.xlu0 %796
      %v799 = vmul.f32 %v794, %v797
      %801 = vrot.lane.b32.xlu0 %v799, 64
      %v802 = vpop.permute.xlu0 %801
      %v804 = vadd.f32 %v706, %v802
      %v805 = vtanh.pop %v804
      %v806 = vsub.f32 1.0, %v794
      %808 = vrot.lane.b32.xlu0 %v805, 96
      %v809 = vpop.permute.xlu0 %808
      %v811 = vmul.f32 %v806, %v809
      %v812 = vmul.f32 %v794, %v703
      %v813 = vadd.f32 %v811, %v812
      %815 = vrot.lane.b32.xlu0 %v813, 96
      %v816 = vpop.permute.xlu0 %815
      %s818 = scalar_lea.vmem [#allocation9], %s704
      %vm819 = vcmask 254976
      %820 = vst.msk [vmem:[%s818] sm:$0x3] %vm819, %v816
    $region38: #{tpu_custom_call.1} parent=1 // loop_footer
      %s702 = sadd.s32 1, %s698
    $region39: #{tpu_custom_call.1} parent=1 // loop_footer_branch
      %697 = sbr.rel target = $region35
    $region40: #{tpu_custom_call.1} parent=1 // loop_exit
      _
    %822 = vrot.lane.b32.xlu0 %v703, 96
    %v823 = vpop.permute.xlu0 %822
    %vm825 = vcmask 254976
    %826 = vst.msk [vmem:[#allocation10] sm:$0x3] %vm825, %v823
    %s827 = scalar_lea.vmem [#allocation6], 32
    %v828 = vld [vmem:[%s827] sm:$0xff]
    %v829 = vld [vmem:[%s827 + $0x8] sm:$0xff]
    %v830 = vld [vmem:[%s827 + $0x10] sm:$0xff]
    %v831 = vld [vmem:[%s827 + $0x18] sm:$0xff]
    %s832 = scalar_lea.vmem [#allocation8], 32
    %v833 = vld [vmem:[%s832] sm:$0xff]
    %v834 = vld [vmem:[%s832 + $0x8] sm:$0xff]
    %v835 = vld [vmem:[%s832 + $0x10] sm:$0xff]
    %v836 = vld [vmem:[%s832 + $0x18] sm:$0xff]
    %s837 = scalar_lea.vmem %s3, 1
    %v838 = vld [vmem:[%s837] sm:$0x1]
    %s839 = scalar_lea.vmem %s4, 1
    %v840 = vld [vmem:[%s839] sm:$0x1]
    %v841 = vld [vmem:[#allocation9] sm:$0x3]
    %v843 = vlaneseq
    %v844 = vshrl.u32 %v843, 7
    %v845 = vsub.s32 0, %v844
    %v846 = vrot.slane %v838, %v845
    %v849 = vsel %vm82, %v841, 0
    %851 = vmatprep.subr.mxu0 0.0
    %852 = vmatpush1.msra.mxu0 %v828
    %853 = vmatprep.subr.mxu0 0.0
    %854 = vmatpush1.msra.mxu0 %v829
    %855 = vmatprep.subr.mxu0 0.0
    %856 = vmatpush1.msra.mxu0 %v830
    %857 = vmatprep.subr.mxu0 0.0
    %858 = vmatpush1.msra.mxu0 %v831
    %859 = vmatprep.subr.mxu0 0.0
    %860 = vmatpush1.msra.mxu0 0.0
    %861 = vmatprep.subr.mxu0 0.0
    %862 = vmatpush1.msra.mxu0 0.0
    %863 = vmatprep.subr.mxu0 0.0
    %864 = vmatpush1.msra.mxu0 0.0
    %865 = vmatprep.subr.mxu0 0.0
    %866 = vmatpush1.msra.mxu0 0.0
    %867 = vmatprep.subr.mxu0 0.0
    %868 = vmatpush1.msra.mxu0 0.0
    %869 = vmatprep.subr.mxu0 0.0
    %870 = vmatpush1.msra.mxu0 0.0
    %871 = vmatprep.subr.mxu0 0.0
    %872 = vmatpush1.msra.mxu0 0.0
    %873 = vmatprep.subr.mxu0 0.0
    %874 = vmatpush1.msra.mxu0 0.0
    %875 = vmatprep.subr.mxu0 0.0
    %876 = vmatpush1.msra.mxu0 0.0
    %877 = vmatprep.subr.mxu0 0.0
    %878 = vmatpush1.msra.mxu0 0.0
    %879 = vmatprep.subr.mxu0 0.0
    %880 = vmatpush1.msra.mxu0 0.0
    %881 = vmatprep.subr.mxu0 0.0
    %882 = vmatpush1.msra.mxu0 0.0
    %883 = vmatprep.subr.mxu0 0.0
    %884 = vmatpush1.msra.mxu0 0.0
    %885 = vmatprep.subr.mxu0 0.0
    %886 = vmatpush1.msra.mxu0 0.0
    %887 = vmatprep.subr.mxu0 0.0
    %888 = vmatpush1.msra.mxu0 0.0
    %889 = vmatprep.subr.mxu0 0.0
    %890 = vmatpush1.msra.mxu0 0.0
    %891 = vmatprep.subr.mxu0 0.0
    %892 = vmatpush1.msra.mxu0 0.0
    %893 = vmatprep.subr.mxu0 0.0
    %894 = vmatpush1.msra.mxu0 0.0
    %895 = vmatprep.subr.mxu0 0.0
    %896 = vmatpush1.msra.mxu0 0.0
    %897 = vmatprep.subr.mxu0 0.0
    %898 = vmatpush1.msra.mxu0 0.0
    %899 = vmatprep.subr.mxu0 0.0
    %900 = vmatpush1.msra.mxu0 0.0
    %901 = vmatprep.subr.mxu0 0.0
    %902 = vmatpush1.msra.mxu0 0.0
    %903 = vmatprep.subr.mxu0 0.0
    %904 = vmatpush1.msra.mxu0 0.0
    %905 = vmatprep.subr.mxu0 0.0
    %906 = vmatpush1.msra.mxu0 0.0
    %907 = vmatprep.subr.mxu0 0.0
    %908 = vmatpush1.msra.mxu0 0.0
    %909 = vmatprep.subr.mxu0 0.0
    %910 = vmatpush1.msra.mxu0 0.0
    %911 = vmatprep.subr.mxu0 0.0
    %912 = vmatpush1.msra.mxu0 0.0
    %913 = vmatprep.subr.mxu0 0.0
    %914 = vmatpush1.msra.mxu0 0.0
    %915 = vmatprep.mubr.f32.mxu0 0.0
    %916 = vmatmul.mubr.f32.gmra.mrb[0].mxu0 %v849
    %v917 = vpop.f32.mrb[0].mxu0
    %v918 = vadd.f32 %v846, %v917
    %v919 = vpop.f32.mrb[0].mxu0
    %920 = vdwg.mxu0
    %921 = vst.msk [vmem:[#allocation2] sm:$0x3] %vm156, %v918
    %s922 = scalar_lea.vmem [#allocation9], 2
    %v923 = vld [vmem:[%s922] sm:$0x3]
    %v925 = vsel %vm82, %v923, 0
    %927 = vmatprep.subr.mxu0 0.0
    %928 = vmatpush1.msra.mxu0 %v828
    %929 = vmatprep.subr.mxu0 0.0
    %930 = vmatpush1.msra.mxu0 %v829
    %931 = vmatprep.subr.mxu0 0.0
    %932 = vmatpush1.msra.mxu0 %v830
    %933 = vmatprep.subr.mxu0 0.0
    %934 = vmatpush1.msra.mxu0 %v831
    %935 = vmatprep.subr.mxu0 0.0
    %936 = vmatpush1.msra.mxu0 0.0
    %937 = vmatprep.subr.mxu0 0.0
    %938 = vmatpush1.msra.mxu0 0.0
    %939 = vmatprep.subr.mxu0 0.0
    %940 = vmatpush1.msra.mxu0 0.0
    %941 = vmatprep.subr.mxu0 0.0
    %942 = vmatpush1.msra.mxu0 0.0
    %943 = vmatprep.subr.mxu0 0.0
    %944 = vmatpush1.msra.mxu0 0.0
    %945 = vmatprep.subr.mxu0 0.0
    %946 = vmatpush1.msra.mxu0 0.0
    %947 = vmatprep.subr.mxu0 0.0
    %948 = vmatpush1.msra.mxu0 0.0
    %949 = vmatprep.subr.mxu0 0.0
    %950 = vmatpush1.msra.mxu0 0.0
    %951 = vmatprep.subr.mxu0 0.0
    %952 = vmatpush1.msra.mxu0 0.0
    %953 = vmatprep.subr.mxu0 0.0
    %954 = vmatpush1.msra.mxu0 0.0
    %955 = vmatprep.subr.mxu0 0.0
    %956 = vmatpush1.msra.mxu0 0.0
    %957 = vmatprep.subr.mxu0 0.0
    %958 = vmatpush1.msra.mxu0 0.0
    %959 = vmatprep.subr.mxu0 0.0
    %960 = vmatpush1.msra.mxu0 0.0
    %961 = vmatprep.subr.mxu0 0.0
    %962 = vmatpush1.msra.mxu0 0.0
    %963 = vmatprep.subr.mxu0 0.0
    %964 = vmatpush1.msra.mxu0 0.0
    %965 = vmatprep.subr.mxu0 0.0
    %966 = vmatpush1.msra.mxu0 0.0
    %967 = vmatprep.subr.mxu0 0.0
    %968 = vmatpush1.msra.mxu0 0.0
    %969 = vmatprep.subr.mxu0 0.0
    %970 = vmatpush1.msra.mxu0 0.0
    %971 = vmatprep.subr.mxu0 0.0
    %972 = vmatpush1.msra.mxu0 0.0
    %973 = vmatprep.subr.mxu0 0.0
    %974 = vmatpush1.msra.mxu0 0.0
    %975 = vmatprep.subr.mxu0 0.0
    %976 = vmatpush1.msra.mxu0 0.0
    %977 = vmatprep.subr.mxu0 0.0
    %978 = vmatpush1.msra.mxu0 0.0
    %979 = vmatprep.subr.mxu0 0.0
    %980 = vmatpush1.msra.mxu0 0.0
    %981 = vmatprep.subr.mxu0 0.0
    %982 = vmatpush1.msra.mxu0 0.0
    %983 = vmatprep.subr.mxu0 0.0
    %984 = vmatpush1.msra.mxu0 0.0
    %985 = vmatprep.subr.mxu0 0.0
    %986 = vmatpush1.msra.mxu0 0.0
    %987 = vmatprep.subr.mxu0 0.0
    %988 = vmatpush1.msra.mxu0 0.0
    %989 = vmatprep.subr.mxu0 0.0
    %990 = vmatpush1.msra.mxu0 0.0
    %991 = vmatprep.mubr.f32.mxu0 0.0
    %992 = vmatmul.mubr.f32.gmra.mrb[0].mxu0 %v925
    %v993 = vpop.f32.mrb[0].mxu0
    %v994 = vadd.f32 %v846, %v993
    %v995 = vpop.f32.mrb[0].mxu0
    %996 = vdwg.mxu0
    %997 = vst.msk [vmem:[%s233] sm:$0x3] %vm156, %v994
    %s998 = scalar_lea.vmem [#allocation9], 4
    %v999 = vld [vmem:[%s998] sm:$0x3]
    %v1001 = vsel %vm82, %v999, 0
    %1003 = vmatprep.subr.mxu0 0.0
    %1004 = vmatpush1.msra.mxu0 %v828
    %1005 = vmatprep.subr.mxu0 0.0
    %1006 = vmatpush1.msra.mxu0 %v829
    %1007 = vmatprep.subr.mxu0 0.0
    %1008 = vmatpush1.msra.mxu0 %v830
    %1009 = vmatprep.subr.mxu0 0.0
    %1010 = vmatpush1.msra.mxu0 %v831
    %1011 = vmatprep.subr.mxu0 0.0
    %1012 = vmatpush1.msra.mxu0 0.0
    %1013 = vmatprep.subr.mxu0 0.0
    %1014 = vmatpush1.msra.mxu0 0.0
    %1015 = vmatprep.subr.mxu0 0.0
    %1016 = vmatpush1.msra.mxu0 0.0
    %1017 = vmatprep.subr.mxu0 0.0
    %1018 = vmatpush1.msra.mxu0 0.0
    %1019 = vmatprep.subr.mxu0 0.0
    %1020 = vmatpush1.msra.mxu0 0.0
    %1021 = vmatprep.subr.mxu0 0.0
    %1022 = vmatpush1.msra.mxu0 0.0
    %1023 = vmatprep.subr.mxu0 0.0
    %1024 = vmatpush1.msra.mxu0 0.0
    %1025 = vmatprep.subr.mxu0 0.0
    %1026 = vmatpush1.msra.mxu0 0.0
    %1027 = vmatprep.subr.mxu0 0.0
    %1028 = vmatpush1.msra.mxu0 0.0
    %1029 = vmatprep.subr.mxu0 0.0
    %1030 = vmatpush1.msra.mxu0 0.0
    %1031 = vmatprep.subr.mxu0 0.0
    %1032 = vmatpush1.msra.mxu0 0.0
    %1033 = vmatprep.subr.mxu0 0.0
    %1034 = vmatpush1.msra.mxu0 0.0
    %1035 = vmatprep.subr.mxu0 0.0
    %1036 = vmatpush1.msra.mxu0 0.0
    %1037 = vmatprep.subr.mxu0 0.0
    %1038 = vmatpush1.msra.mxu0 0.0
    %1039 = vmatprep.subr.mxu0 0.0
    %1040 = vmatpush1.msra.mxu0 0.0
    %1041 = vmatprep.subr.mxu0 0.0
    %1042 = vmatpush1.msra.mxu0 0.0
    %1043 = vmatprep.subr.mxu0 0.0
    %1044 = vmatpush1.msra.mxu0 0.0
    %1045 = vmatprep.subr.mxu0 0.0
    %1046 = vmatpush1.msra.mxu0 0.0
    %1047 = vmatprep.subr.mxu0 0.0
    %1048 = vmatpush1.msra.mxu0 0.0
    %1049 = vmatprep.subr.mxu0 0.0
    %1050 = vmatpush1.msra.mxu0 0.0
    %1051 = vmatprep.subr.mxu0 0.0
    %1052 = vmatpush1.msra.mxu0 0.0
    %1053 = vmatprep.subr.mxu0 0.0
    %1054 = vmatpush1.msra.mxu0 0.0
    %1055 = vmatprep.subr.mxu0 0.0
    %1056 = vmatpush1.msra.mxu0 0.0
    %1057 = vmatprep.subr.mxu0 0.0
    %1058 = vmatpush1.msra.mxu0 0.0
    %1059 = vmatprep.subr.mxu0 0.0
    %1060 = vmatpush1.msra.mxu0 0.0
    %1061 = vmatprep.subr.mxu0 0.0
    %1062 = vmatpush1.msra.mxu0 0.0
    %1063 = vmatprep.subr.mxu0 0.0
    %1064 = vmatpush1.msra.mxu0 0.0
    %1065 = vmatprep.subr.mxu0 0.0
    %1066 = vmatpush1.msra.mxu0 0.0
    %1067 = vmatprep.mubr.f32.mxu0 0.0
    %1068 = vmatmul.mubr.f32.gmra.mrb[0].mxu0 %v1001
    %v1069 = vpop.f32.mrb[0].mxu0
    %v1070 = vadd.f32 %v846, %v1069
    %v1071 = vpop.f32.mrb[0].mxu0
    %1072 = vdwg.mxu0
    %1073 = vst.msk [vmem:[%s310] sm:$0x3] %vm156, %v1070
    %s1074 = scalar_lea.vmem [#allocation9], 6
    %v1075 = vld [vmem:[%s1074] sm:$0x3]
    %v1077 = vsel %vm82, %v1075, 0
    %1079 = vmatprep.subr.mxu0 0.0
    %1080 = vmatpush1.msra.mxu0 %v828
    %1081 = vmatprep.subr.mxu0 0.0
    %1082 = vmatpush1.msra.mxu0 %v829
    %1083 = vmatprep.subr.mxu0 0.0
    %1084 = vmatpush1.msra.mxu0 %v830
    %1085 = vmatprep.subr.mxu0 0.0
    %1086 = vmatpush1.msra.mxu0 %v831
    %1087 = vmatprep.subr.mxu0 0.0
    %1088 = vmatpush1.msra.mxu0 0.0
    %1089 = vmatprep.subr.mxu0 0.0
    %1090 = vmatpush1.msra.mxu0 0.0
    %1091 = vmatprep.subr.mxu0 0.0
    %1092 = vmatpush1.msra.mxu0 0.0
    %1093 = vmatprep.subr.mxu0 0.0
    %1094 = vmatpush1.msra.mxu0 0.0
    %1095 = vmatprep.subr.mxu0 0.0
    %1096 = vmatpush1.msra.mxu0 0.0
    %1097 = vmatprep.subr.mxu0 0.0
    %1098 = vmatpush1.msra.mxu0 0.0
    %1099 = vmatprep.subr.mxu0 0.0
    %1100 = vmatpush1.msra.mxu0 0.0
    %1101 = vmatprep.subr.mxu0 0.0
    %1102 = vmatpush1.msra.mxu0 0.0
    %1103 = vmatprep.subr.mxu0 0.0
    %1104 = vmatpush1.msra.mxu0 0.0
    %1105 = vmatprep.subr.mxu0 0.0
    %1106 = vmatpush1.msra.mxu0 0.0
    %1107 = vmatprep.subr.mxu0 0.0
    %1108 = vmatpush1.msra.mxu0 0.0
    %1109 = vmatprep.subr.mxu0 0.0
    %1110 = vmatpush1.msra.mxu0 0.0
    %1111 = vmatprep.subr.mxu0 0.0
    %1112 = vmatpush1.msra.mxu0 0.0
    %1113 = vmatprep.subr.mxu0 0.0
    %1114 = vmatpush1.msra.mxu0 0.0
    %1115 = vmatprep.subr.mxu0 0.0
    %1116 = vmatpush1.msra.mxu0 0.0
    %1117 = vmatprep.subr.mxu0 0.0
    %1118 = vmatpush1.msra.mxu0 0.0
    %1119 = vmatprep.subr.mxu0 0.0
    %1120 = vmatpush1.msra.mxu0 0.0
    %1121 = vmatprep.subr.mxu0 0.0
    %1122 = vmatpush1.msra.mxu0 0.0
    %1123 = vmatprep.subr.mxu0 0.0
    %1124 = vmatpush1.msra.mxu0 0.0
    %1125 = vmatprep.subr.mxu0 0.0
    %1126 = vmatpush1.msra.mxu0 0.0
    %1127 = vmatprep.subr.mxu0 0.0
    %1128 = vmatpush1.msra.mxu0 0.0
    %1129 = vmatprep.subr.mxu0 0.0
    %1130 = vmatpush1.msra.mxu0 0.0
    %1131 = vmatprep.subr.mxu0 0.0
    %1132 = vmatpush1.msra.mxu0 0.0
    %1133 = vmatprep.subr.mxu0 0.0
    %1134 = vmatpush1.msra.mxu0 0.0
    %1135 = vmatprep.subr.mxu0 0.0
    %1136 = vmatpush1.msra.mxu0 0.0
    %1137 = vmatprep.subr.mxu0 0.0
    %1138 = vmatpush1.msra.mxu0 0.0
    %1139 = vmatprep.subr.mxu0 0.0
    %1140 = vmatpush1.msra.mxu0 0.0
    %1141 = vmatprep.subr.mxu0 0.0
    %1142 = vmatpush1.msra.mxu0 0.0
    %1143 = vmatprep.mubr.f32.mxu0 0.0
    %1144 = vmatmul.mubr.f32.gmra.mrb[0].mxu0 %v1077
    %v1145 = vpop.f32.mrb[0].mxu0
    %v1146 = vadd.f32 %v846, %v1145
    %v1147 = vpop.f32.mrb[0].mxu0
    %1148 = vdwg.mxu0
    %1149 = vst.msk [vmem:[%s387] sm:$0x3] %vm156, %v1146
    %s1150 = scalar_lea.vmem [#allocation9], 8
    %v1151 = vld [vmem:[%s1150] sm:$0x3]
    %v1153 = vsel %vm82, %v1151, 0
    %1155 = vmatprep.subr.mxu0 0.0
    %1156 = vmatpush1.msra.mxu0 %v828
    %1157 = vmatprep.subr.mxu0 0.0
    %1158 = vmatpush1.msra.mxu0 %v829
    %1159 = vmatprep.subr.mxu0 0.0
    %1160 = vmatpush1.msra.mxu0 %v830
    %1161 = vmatprep.subr.mxu0 0.0
    %1162 = vmatpush1.msra.mxu0 %v831
    %1163 = vmatprep.subr.mxu0 0.0
    %1164 = vmatpush1.msra.mxu0 0.0
    %1165 = vmatprep.subr.mxu0 0.0
    %1166 = vmatpush1.msra.mxu0 0.0
    %1167 = vmatprep.subr.mxu0 0.0
    %1168 = vmatpush1.msra.mxu0 0.0
    %1169 = vmatprep.subr.mxu0 0.0
    %1170 = vmatpush1.msra.mxu0 0.0
    %1171 = vmatprep.subr.mxu0 0.0
    %1172 = vmatpush1.msra.mxu0 0.0
    %1173 = vmatprep.subr.mxu0 0.0
    %1174 = vmatpush1.msra.mxu0 0.0
    %1175 = vmatprep.subr.mxu0 0.0
    %1176 = vmatpush1.msra.mxu0 0.0
    %1177 = vmatprep.subr.mxu0 0.0
    %1178 = vmatpush1.msra.mxu0 0.0
    %1179 = vmatprep.subr.mxu0 0.0
    %1180 = vmatpush1.msra.mxu0 0.0
    %1181 = vmatprep.subr.mxu0 0.0
    %1182 = vmatpush1.msra.mxu0 0.0
    %1183 = vmatprep.subr.mxu0 0.0
    %1184 = vmatpush1.msra.mxu0 0.0
    %1185 = vmatprep.subr.mxu0 0.0
    %1186 = vmatpush1.msra.mxu0 0.0
    %1187 = vmatprep.subr.mxu0 0.0
    %1188 = vmatpush1.msra.mxu0 0.0
    %1189 = vmatprep.subr.mxu0 0.0
    %1190 = vmatpush1.msra.mxu0 0.0
    %1191 = vmatprep.subr.mxu0 0.0
    %1192 = vmatpush1.msra.mxu0 0.0
    %1193 = vmatprep.subr.mxu0 0.0
    %1194 = vmatpush1.msra.mxu0 0.0
    %1195 = vmatprep.subr.mxu0 0.0
    %1196 = vmatpush1.msra.mxu0 0.0
    %1197 = vmatprep.subr.mxu0 0.0
    %1198 = vmatpush1.msra.mxu0 0.0
    %1199 = vmatprep.subr.mxu0 0.0
    %1200 = vmatpush1.msra.mxu0 0.0
    %1201 = vmatprep.subr.mxu0 0.0
    %1202 = vmatpush1.msra.mxu0 0.0
    %1203 = vmatprep.subr.mxu0 0.0
    %1204 = vmatpush1.msra.mxu0 0.0
    %1205 = vmatprep.subr.mxu0 0.0
    %1206 = vmatpush1.msra.mxu0 0.0
    %1207 = vmatprep.subr.mxu0 0.0
    %1208 = vmatpush1.msra.mxu0 0.0
    %1209 = vmatprep.subr.mxu0 0.0
    %1210 = vmatpush1.msra.mxu0 0.0
    %1211 = vmatprep.subr.mxu0 0.0
    %1212 = vmatpush1.msra.mxu0 0.0
    %1213 = vmatprep.subr.mxu0 0.0
    %1214 = vmatpush1.msra.mxu0 0.0
    %1215 = vmatprep.subr.mxu0 0.0
    %1216 = vmatpush1.msra.mxu0 0.0
    %1217 = vmatprep.subr.mxu0 0.0
    %1218 = vmatpush1.msra.mxu0 0.0
    %1219 = vmatprep.mubr.f32.mxu0 0.0
    %1220 = vmatmul.mubr.f32.gmra.mrb[0].mxu0 %v1153
    %v1221 = vpop.f32.mrb[0].mxu0
    %v1222 = vadd.f32 %v846, %v1221
    %v1223 = vpop.f32.mrb[0].mxu0
    %1224 = vdwg.mxu0
    %1225 = vst.msk [vmem:[%s464] sm:$0x3] %vm156, %v1222
    %s1226 = scalar_lea.vmem [#allocation9], 10
    %v1227 = vld [vmem:[%s1226] sm:$0x3]
    %v1229 = vsel %vm82, %v1227, 0
    %1231 = vmatprep.subr.mxu0 0.0
    %1232 = vmatpush1.msra.mxu0 %v828
    %1233 = vmatprep.subr.mxu0 0.0
    %1234 = vmatpush1.msra.mxu0 %v829
    %1235 = vmatprep.subr.mxu0 0.0
    %1236 = vmatpush1.msra.mxu0 %v830
    %1237 = vmatprep.subr.mxu0 0.0
    %1238 = vmatpush1.msra.mxu0 %v831
    %1239 = vmatprep.subr.mxu0 0.0
    %1240 = vmatpush1.msra.mxu0 0.0
    %1241 = vmatprep.subr.mxu0 0.0
    %1242 = vmatpush1.msra.mxu0 0.0
    %1243 = vmatprep.subr.mxu0 0.0
    %1244 = vmatpush1.msra.mxu0 0.0
    %1245 = vmatprep.subr.mxu0 0.0
    %1246 = vmatpush1.msra.mxu0 0.0
    %1247 = vmatprep.subr.mxu0 0.0
    %1248 = vmatpush1.msra.mxu0 0.0
    %1249 = vmatprep.subr.mxu0 0.0
    %1250 = vmatpush1.msra.mxu0 0.0
    %1251 = vmatprep.subr.mxu0 0.0
    %1252 = vmatpush1.msra.mxu0 0.0
    %1253 = vmatprep.subr.mxu0 0.0
    %1254 = vmatpush1.msra.mxu0 0.0
    %1255 = vmatprep.subr.mxu0 0.0
    %1256 = vmatpush1.msra.mxu0 0.0
    %1257 = vmatprep.subr.mxu0 0.0
    %1258 = vmatpush1.msra.mxu0 0.0
    %1259 = vmatprep.subr.mxu0 0.0
    %1260 = vmatpush1.msra.mxu0 0.0
    %1261 = vmatprep.subr.mxu0 0.0
    %1262 = vmatpush1.msra.mxu0 0.0
    %1263 = vmatprep.subr.mxu0 0.0
    %1264 = vmatpush1.msra.mxu0 0.0
    %1265 = vmatprep.subr.mxu0 0.0
    %1266 = vmatpush1.msra.mxu0 0.0
    %1267 = vmatprep.subr.mxu0 0.0
    %1268 = vmatpush1.msra.mxu0 0.0
    %1269 = vmatprep.subr.mxu0 0.0
    %1270 = vmatpush1.msra.mxu0 0.0
    %1271 = vmatprep.subr.mxu0 0.0
    %1272 = vmatpush1.msra.mxu0 0.0
    %1273 = vmatprep.subr.mxu0 0.0
    %1274 = vmatpush1.msra.mxu0 0.0
    %1275 = vmatprep.subr.mxu0 0.0
    %1276 = vmatpush1.msra.mxu0 0.0
    %1277 = vmatprep.subr.mxu0 0.0
    %1278 = vmatpush1.msra.mxu0 0.0
    %1279 = vmatprep.subr.mxu0 0.0
    %1280 = vmatpush1.msra.mxu0 0.0
    %1281 = vmatprep.subr.mxu0 0.0
    %1282 = vmatpush1.msra.mxu0 0.0
    %1283 = vmatprep.subr.mxu0 0.0
    %1284 = vmatpush1.msra.mxu0 0.0
    %1285 = vmatprep.subr.mxu0 0.0
    %1286 = vmatpush1.msra.mxu0 0.0
    %1287 = vmatprep.subr.mxu0 0.0
    %1288 = vmatpush1.msra.mxu0 0.0
    %1289 = vmatprep.subr.mxu0 0.0
    %1290 = vmatpush1.msra.mxu0 0.0
    %1291 = vmatprep.subr.mxu0 0.0
    %1292 = vmatpush1.msra.mxu0 0.0
    %1293 = vmatprep.subr.mxu0 0.0
    %1294 = vmatpush1.msra.mxu0 0.0
    %1295 = vmatprep.mubr.f32.mxu0 0.0
    %1296 = vmatmul.mubr.f32.gmra.mrb[0].mxu0 %v1229
    %v1297 = vpop.f32.mrb[0].mxu0
    %v1298 = vadd.f32 %v846, %v1297
    %v1299 = vpop.f32.mrb[0].mxu0
    %1300 = vdwg.mxu0
    %1301 = vst.msk [vmem:[%s541] sm:$0x3] %vm156, %v1298
    %s1302 = scalar_lea.vmem [#allocation9], 12
    %v1303 = vld [vmem:[%s1302] sm:$0x3]
    %v1305 = vsel %vm82, %v1303, 0
    %1307 = vmatprep.subr.mxu0 0.0
    %1308 = vmatpush1.msra.mxu0 %v828
    %1309 = vmatprep.subr.mxu0 0.0
    %1310 = vmatpush1.msra.mxu0 %v829
    %1311 = vmatprep.subr.mxu0 0.0
    %1312 = vmatpush1.msra.mxu0 %v830
    %1313 = vmatprep.subr.mxu0 0.0
    %1314 = vmatpush1.msra.mxu0 %v831
    %1315 = vmatprep.subr.mxu0 0.0
    %1316 = vmatpush1.msra.mxu0 0.0
    %1317 = vmatprep.subr.mxu0 0.0
    %1318 = vmatpush1.msra.mxu0 0.0
    %1319 = vmatprep.subr.mxu0 0.0
    %1320 = vmatpush1.msra.mxu0 0.0
    %1321 = vmatprep.subr.mxu0 0.0
    %1322 = vmatpush1.msra.mxu0 0.0
    %1323 = vmatprep.subr.mxu0 0.0
    %1324 = vmatpush1.msra.mxu0 0.0
    %1325 = vmatprep.subr.mxu0 0.0
    %1326 = vmatpush1.msra.mxu0 0.0
    %1327 = vmatprep.subr.mxu0 0.0
    %1328 = vmatpush1.msra.mxu0 0.0
    %1329 = vmatprep.subr.mxu0 0.0
    %1330 = vmatpush1.msra.mxu0 0.0
    %1331 = vmatprep.subr.mxu0 0.0
    %1332 = vmatpush1.msra.mxu0 0.0
    %1333 = vmatprep.subr.mxu0 0.0
    %1334 = vmatpush1.msra.mxu0 0.0
    %1335 = vmatprep.subr.mxu0 0.0
    %1336 = vmatpush1.msra.mxu0 0.0
    %1337 = vmatprep.subr.mxu0 0.0
    %1338 = vmatpush1.msra.mxu0 0.0
    %1339 = vmatprep.subr.mxu0 0.0
    %1340 = vmatpush1.msra.mxu0 0.0
    %1341 = vmatprep.subr.mxu0 0.0
    %1342 = vmatpush1.msra.mxu0 0.0
    %1343 = vmatprep.subr.mxu0 0.0
    %1344 = vmatpush1.msra.mxu0 0.0
    %1345 = vmatprep.subr.mxu0 0.0
    %1346 = vmatpush1.msra.mxu0 0.0
    %1347 = vmatprep.subr.mxu0 0.0
    %1348 = vmatpush1.msra.mxu0 0.0
    %1349 = vmatprep.subr.mxu0 0.0
    %1350 = vmatpush1.msra.mxu0 0.0
    %1351 = vmatprep.subr.mxu0 0.0
    %1352 = vmatpush1.msra.mxu0 0.0
    %1353 = vmatprep.subr.mxu0 0.0
    %1354 = vmatpush1.msra.mxu0 0.0
    %1355 = vmatprep.subr.mxu0 0.0
    %1356 = vmatpush1.msra.mxu0 0.0
    %1357 = vmatprep.subr.mxu0 0.0
    %1358 = vmatpush1.msra.mxu0 0.0
    %1359 = vmatprep.subr.mxu0 0.0
    %1360 = vmatpush1.msra.mxu0 0.0
    %1361 = vmatprep.subr.mxu0 0.0
    %1362 = vmatpush1.msra.mxu0 0.0
    %1363 = vmatprep.subr.mxu0 0.0
    %1364 = vmatpush1.msra.mxu0 0.0
    %1365 = vmatprep.subr.mxu0 0.0
    %1366 = vmatpush1.msra.mxu0 0.0
    %1367 = vmatprep.subr.mxu0 0.0
    %1368 = vmatpush1.msra.mxu0 0.0
    %1369 = vmatprep.subr.mxu0 0.0
    %1370 = vmatpush1.msra.mxu0 0.0
    %1371 = vmatprep.mubr.f32.mxu0 0.0
    %1372 = vmatmul.mubr.f32.gmra.mrb[0].mxu0 %v1305
    %v1373 = vpop.f32.mrb[0].mxu0
    %v1374 = vadd.f32 %v846, %v1373
    %v1375 = vpop.f32.mrb[0].mxu0
    %1376 = vdwg.mxu0
    %1377 = vst.msk [vmem:[%s618] sm:$0x3] %vm156, %v1374
    %s1378 = scalar_lea.vmem [#allocation9], 14
    %v1379 = vld [vmem:[%s1378] sm:$0x3]
    %v1381 = vsel %vm82, %v1379, 0
    %1383 = vmatprep.subr.mxu0 0.0
    %1384 = vmatpush1.msra.mxu0 %v828
    %1385 = vmatprep.subr.mxu0 0.0
    %1386 = vmatpush1.msra.mxu0 %v829
    %1387 = vmatprep.subr.mxu0 0.0
    %1388 = vmatpush1.msra.mxu0 %v830
    %1389 = vmatprep.subr.mxu0 0.0
    %1390 = vmatpush1.msra.mxu0 %v831
    %1391 = vmatprep.subr.mxu0 0.0
    %1392 = vmatpush1.msra.mxu0 0.0
    %1393 = vmatprep.subr.mxu0 0.0
    %1394 = vmatpush1.msra.mxu0 0.0
    %1395 = vmatprep.subr.mxu0 0.0
    %1396 = vmatpush1.msra.mxu0 0.0
    %1397 = vmatprep.subr.mxu0 0.0
    %1398 = vmatpush1.msra.mxu0 0.0
    %1399 = vmatprep.subr.mxu0 0.0
    %1400 = vmatpush1.msra.mxu0 0.0
    %1401 = vmatprep.subr.mxu0 0.0
    %1402 = vmatpush1.msra.mxu0 0.0
    %1403 = vmatprep.subr.mxu0 0.0
    %1404 = vmatpush1.msra.mxu0 0.0
    %1405 = vmatprep.subr.mxu0 0.0
    %1406 = vmatpush1.msra.mxu0 0.0
    %1407 = vmatprep.subr.mxu0 0.0
    %1408 = vmatpush1.msra.mxu0 0.0
    %1409 = vmatprep.subr.mxu0 0.0
    %1410 = vmatpush1.msra.mxu0 0.0
    %1411 = vmatprep.subr.mxu0 0.0
    %1412 = vmatpush1.msra.mxu0 0.0
    %1413 = vmatprep.subr.mxu0 0.0
    %1414 = vmatpush1.msra.mxu0 0.0
    %1415 = vmatprep.subr.mxu0 0.0
    %1416 = vmatpush1.msra.mxu0 0.0
    %1417 = vmatprep.subr.mxu0 0.0
    %1418 = vmatpush1.msra.mxu0 0.0
    %1419 = vmatprep.subr.mxu0 0.0
    %1420 = vmatpush1.msra.mxu0 0.0
    %1421 = vmatprep.subr.mxu0 0.0
    %1422 = vmatpush1.msra.mxu0 0.0
    %1423 = vmatprep.subr.mxu0 0.0
    %1424 = vmatpush1.msra.mxu0 0.0
    %1425 = vmatprep.subr.mxu0 0.0
    %1426 = vmatpush1.msra.mxu0 0.0
    %1427 = vmatprep.subr.mxu0 0.0
    %1428 = vmatpush1.msra.mxu0 0.0
    %1429 = vmatprep.subr.mxu0 0.0
    %1430 = vmatpush1.msra.mxu0 0.0
    %1431 = vmatprep.subr.mxu0 0.0
    %1432 = vmatpush1.msra.mxu0 0.0
    %1433 = vmatprep.subr.mxu0 0.0
    %1434 = vmatpush1.msra.mxu0 0.0
    %1435 = vmatprep.subr.mxu0 0.0
    %1436 = vmatpush1.msra.mxu0 0.0
    %1437 = vmatprep.subr.mxu0 0.0
    %1438 = vmatpush1.msra.mxu0 0.0
    %1439 = vmatprep.subr.mxu0 0.0
    %1440 = vmatpush1.msra.mxu0 0.0
    %1441 = vmatprep.subr.mxu0 0.0
    %1442 = vmatpush1.msra.mxu0 0.0
    %1443 = vmatprep.subr.mxu0 0.0
    %1444 = vmatpush1.msra.mxu0 0.0
    %1445 = vmatprep.subr.mxu0 0.0
    %1446 = vmatpush1.msra.mxu0 0.0
    %1447 = vmatprep.mubr.f32.mxu0 0.0
    %1448 = vmatmul.mubr.f32.gmra.mrb[0].mxu0 %v1381
    %v1449 = vpop.f32.mrb[0].mxu0
    %v1450 = vadd.f32 %v846, %v1449
    %v1451 = vpop.f32.mrb[0].mxu0
    %1452 = vdwg.mxu0
    %1453 = vst.msk [vmem:[%s695] sm:$0x3] %vm156, %v1450
    loop: start=0, step=1, limit=8
    $region41: #{tpu_custom_call.1} parent=1 // loop_pre_header
      _
    $region42: #{tpu_custom_call.1} parent=1 // loop_header
      %s1455 = sphi 0, %s1459
      %p1456 = scmp.ge.s32.totalorder %s1455, 8
      %v1460 = vphi 0.0, %v1570
    $region43: #{tpu_custom_call.1} parent=1 // loop_header_branch
      %1458 = sbr.rel (%p1456) target = $region47
    $region44: #{tpu_custom_call.1} parent=1 // loop_body
      %s1461 = smul.u32 %s1455, 2
      %s1462 = scalar_lea.vmem [#allocation2], %s1461
      %v1463 = vld [vmem:[%s1462] sm:$0x3]
      %v1465 = vlaneseq
      %v1466 = vshrl.u32 %v1465, 7
      %v1467 = vsub.s32 0, %v1466
      %v1468 = vrot.slane %v840, %v1467
      %1471 = vrot.lane.b32.xlu0 %v1460, 96
      %v1472 = vpop.permute.xlu0 %1471
      %v1473 = vsel %vm82, %v1472, 0
      %1475 = vmatprep.subr.mxu0 0.0
      %1476 = vmatpush1.msra.mxu0 %v833
      %1477 = vmatprep.subr.mxu0 0.0
      %1478 = vmatpush1.msra.mxu0 %v834
      %1479 = vmatprep.subr.mxu0 0.0
      %1480 = vmatpush1.msra.mxu0 %v835
      %1481 = vmatprep.subr.mxu0 0.0
      %1482 = vmatpush1.msra.mxu0 %v836
      %1483 = vmatprep.subr.mxu0 0.0
      %1484 = vmatpush1.msra.mxu0 0.0
      %1485 = vmatprep.subr.mxu0 0.0
      %1486 = vmatpush1.msra.mxu0 0.0
      %1487 = vmatprep.subr.mxu0 0.0
      %1488 = vmatpush1.msra.mxu0 0.0
      %1489 = vmatprep.subr.mxu0 0.0
      %1490 = vmatpush1.msra.mxu0 0.0
      %1491 = vmatprep.subr.mxu0 0.0
      %1492 = vmatpush1.msra.mxu0 0.0
      %1493 = vmatprep.subr.mxu0 0.0
      %1494 = vmatpush1.msra.mxu0 0.0
      %1495 = vmatprep.subr.mxu0 0.0
      %1496 = vmatpush1.msra.mxu0 0.0
      %1497 = vmatprep.subr.mxu0 0.0
      %1498 = vmatpush1.msra.mxu0 0.0
      %1499 = vmatprep.subr.mxu0 0.0
      %1500 = vmatpush1.msra.mxu0 0.0
      %1501 = vmatprep.subr.mxu0 0.0
      %1502 = vmatpush1.msra.mxu0 0.0
      %1503 = vmatprep.subr.mxu0 0.0
      %1504 = vmatpush1.msra.mxu0 0.0
      %1505 = vmatprep.subr.mxu0 0.0
      %1506 = vmatpush1.msra.mxu0 0.0
      %1507 = vmatprep.subr.mxu0 0.0
      %1508 = vmatpush1.msra.mxu0 0.0
      %1509 = vmatprep.subr.mxu0 0.0
      %1510 = vmatpush1.msra.mxu0 0.0
      %1511 = vmatprep.subr.mxu0 0.0
      %1512 = vmatpush1.msra.mxu0 0.0
      %1513 = vmatprep.subr.mxu0 0.0
      %1514 = vmatpush1.msra.mxu0 0.0
      %1515 = vmatprep.subr.mxu0 0.0
      %1516 = vmatpush1.msra.mxu0 0.0
      %1517 = vmatprep.subr.mxu0 0.0
      %1518 = vmatpush1.msra.mxu0 0.0
      %1519 = vmatprep.subr.mxu0 0.0
      %1520 = vmatpush1.msra.mxu0 0.0
      %1521 = vmatprep.subr.mxu0 0.0
      %1522 = vmatpush1.msra.mxu0 0.0
      %1523 = vmatprep.subr.mxu0 0.0
      %1524 = vmatpush1.msra.mxu0 0.0
      %1525 = vmatprep.subr.mxu0 0.0
      %1526 = vmatpush1.msra.mxu0 0.0
      %1527 = vmatprep.subr.mxu0 0.0
      %1528 = vmatpush1.msra.mxu0 0.0
      %1529 = vmatprep.subr.mxu0 0.0
      %1530 = vmatpush1.msra.mxu0 0.0
      %1531 = vmatprep.subr.mxu0 0.0
      %1532 = vmatpush1.msra.mxu0 0.0
      %1533 = vmatprep.subr.mxu0 0.0
      %1534 = vmatpush1.msra.mxu0 0.0
      %1535 = vmatprep.subr.mxu0 0.0
      %1536 = vmatpush1.msra.mxu0 0.0
      %1537 = vmatprep.subr.mxu0 0.0
      %1538 = vmatpush1.msra.mxu0 0.0
      %1539 = vmatprep.mubr.f32.mxu0 0.0
      %1540 = vmatmul.mubr.f32.gmra.mrb[0].mxu0 %v1473
      %v1541 = vpop.f32.mrb[0].mxu0
      %v1542 = vadd.f32 %v1468, %v1541
      %v1543 = vpop.f32.mrb[0].mxu0
      %1544 = vdwg.mxu0
      %v1545 = vadd.f32 %v1463, %v1542
      %v1546 = vxor.u32 %v1545, 2147483648
      %v1547 = vmul.f32 %v1546, 1.442695
      %v1548 = vpow.pop %v1547
      %v1549 = vadd.f32 %v1548, 1.0
      %v1550 = vrcp.pop %v1549
      %v1551 = vmul.f32 1.0, %v1550
      %1553 = vrot.lane.b32.xlu0 %v1542, 64
      %v1554 = vpop.permute.xlu0 %1553
      %v1556 = vmul.f32 %v1551, %v1554
      %1558 = vrot.lane.b32.xlu0 %v1556, 64
      %v1559 = vpop.permute.xlu0 %1558
      %v1561 = vadd.f32 %v1463, %v1559
      %v1562 = vtanh.pop %v1561
      %v1563 = vsub.f32 1.0, %v1551
      %1565 = vrot.lane.b32.xlu0 %v1562, 96
      %v1566 = vpop.permute.xlu0 %1565
      %v1568 = vmul.f32 %v1563, %v1566
      %v1569 = vmul.f32 %v1551, %v1460
      %v1570 = vadd.f32 %v1568, %v1569
      %1572 = vrot.lane.b32.xlu0 %v1570, 96
      %v1573 = vpop.permute.xlu0 %1572
      %s1575 = scalar_lea.vmem [#allocation9], %s1461
      %1576 = vst.msk [vmem:[%s1575] sm:$0x3] %vm825, %v1573
    $region45: #{tpu_custom_call.1} parent=1 // loop_footer
      %s1459 = sadd.s32 1, %s1455
    $region46: #{tpu_custom_call.1} parent=1 // loop_footer_branch
      %1454 = sbr.rel target = $region42
    $region47: #{tpu_custom_call.1} parent=1 // loop_exit
      _
    %1578 = vrot.lane.b32.xlu0 %v1460, 96
    %v1579 = vpop.permute.xlu0 %1578
    %s1581 = scalar_lea.vmem [#allocation10], 2
    %1582 = vst.msk [vmem:[%s1581] sm:$0x3] %vm825, %v1579
    // Predicated region
    $region48: #{tpu_custom_call.1} parent=1 // pred_check
      _
    $region49: #{tpu_custom_call.1} parent=1 // pred_check_branch
      %1584 = sbr.rel (0) target = $region51
    $region50: #{tpu_custom_call.1} parent=1 // pred_region
      %s1586 = ssub.s32 256, 256
      %1587 = vsyncadd [#allocation5], %s1586
      %s1588 = sshll.u32 [#allocation9], 4
      %s1589 = int_to_ptr.vmem [resolvable:$true] %s1588
      %1594 = dma.vmem_to_hbm [thread:$0]  %s1589, 256, %s5, [#allocation5], 32, 32, 2
    $region51: #{tpu_custom_call.1} parent=1 // pred_fallthru
      _
    // Predicated region
    $region52: #{tpu_custom_call.1} parent=1 // pred_check
      _
    $region53: #{tpu_custom_call.1} parent=1 // pred_check_branch
      %1596 = sbr.rel (0) target = $region55
    $region54: #{tpu_custom_call.1} parent=1 // pred_region
      %s1598 = ssub.s32 64, 64
      %1599 = vsyncadd [#allocation11], %s1598
      %s1600 = sshll.u32 [#allocation10], 4
      %s1601 = int_to_ptr.vmem [resolvable:$true] %s1600
      %1606 = dma.vmem_to_hbm [thread:$0]  %s1601, 64, %s6, [#allocation11], 32, 32, 2
    $region55: #{tpu_custom_call.1} parent=1 // pred_fallthru
      _
    // Predicated region
    $region56: #{tpu_custom_call.1} parent=1 // pred_check
      _
    $region57: #{tpu_custom_call.1} parent=1 // pred_check_branch
      %1608 = sbr.rel (0) target = $region59
    $region58: #{tpu_custom_call.1} parent=1 // pred_region
      %1609 = dma.done [#allocation5], 256
    $region59: #{tpu_custom_call.1} parent=1 // pred_fallthru
      _
    // Predicated region
    $region60: #{tpu_custom_call.1} parent=1 // pred_check
      _
    $region61: #{tpu_custom_call.1} parent=1 // pred_check_branch
      %1611 = sbr.rel (0) target = $region63
    $region62: #{tpu_custom_call.1} parent=1 // pred_region
      %1612 = dma.done [#allocation11], 64
    $region63: #{tpu_custom_call.1} parent=1 // pred_fallthru
      _
    %1613 = vsyncpa [#allocation4], 1
    %1614 = vsyncpa [#allocation7], 1
    %1615 = vsyncpa [#allocation5], 1
    %1616 = vsyncpa [#allocation11], 1

</llo_original>
